<compile_context>
chip_gen: v7x
topology: tpu7x:2x2x1
jax: 0.10.0
libtpu: 0.0.40
codegen_flags: <defaults>
</compile_context>

<pallas_src>
import numpy as np
import jax
import jax.numpy as jnp
from jax.experimental import pallas as pl
from jax.experimental.pallas import tpu as pltpu


# ----------------------------------------------------------------------------
# KNRM kernel mus / sigmas (identical to the PyTorch module)
# ----------------------------------------------------------------------------
def kernel_mus(n_kernels: int):
    l_mu = [1.0]
    if n_kernels == 1:
        return l_mu
    bin_size = 2.0 / (n_kernels - 1)
    l_mu.append(1 - bin_size / 2)
    for i in range(1, n_kernels - 1):
        l_mu.append(l_mu[i] - bin_size)
    return l_mu


def kernel_sigmas(n_kernels: int):
    bin_size = 2.0 / (n_kernels - 1)
    l_sigma = [0.0001]
    if n_kernels == 1:
        return l_sigma
    l_sigma += [0.5 * bin_size] * (n_kernels - 1)
    return l_sigma


# ----------------------------------------------------------------------------
# Pallas kernel factory: constants (mu, -1/(2 sigma^2), fc weights) are baked in
# as trace-time Python scalars.  Grid = (batch_tile, doc_chunk).
# ----------------------------------------------------------------------------
def _make_knrm_kernel(mu, c, w, n_kernels, exact_thr):
    def kernel(q_emb_ref, d_emb_ref, q_mask_ref, d_mask_ref, out_ref, pooled_ref):
        d_idx = pl.program_id(1)

        @pl.when(d_idx == 0)
        def _init():                                    # fresh accumulator per batch tile
            pooled_ref[...] = jnp.zeros_like(pooled_ref)

        qe = q_emb_ref[...]                             # (Bt, Q,  E)
        de = d_emb_ref[...]                             # (Bt, Dt, E)
        dm = d_mask_ref[...]                            # (Bt, Dt, 1)

        def l2_normalize(x):
            ss = jnp.sum(x * x, axis=-1, keepdims=True)
            r = jax.lax.rsqrt(ss)                       # EUP
            # One Newton step -> full-f32 rsqrt.  Needed: the exact-match kernel /
            # threshold resolves |t-1| at the 1e-4 scale.
            r = r * (1.5 - 0.5 * ss * r * r)
            return x * r

        qn = l2_normalize(qe)
        dn = l2_normalize(de)

        # Cosine-similarity chunk on the MXU, f32-exact.  (Mosaic only exposes
        # DEFAULT / HIGHEST contract precision; HIGH is not available, and DEFAULT
        # would break the exact-match kernel.)
        trans = jax.lax.dot_general(
            qn, dn,
            dimension_numbers=(((2,), (2,)), ((0,), (0,))),
            precision=jax.lax.Precision.HIGHEST,
            preferred_element_type=jnp.float32,
        )                                               # (Bt, Q, Dt)

        # All NK gaussian responses, stacked along the query axis so the masked
        # doc-sum is ONE merged batched MXU matvec instead of NK N=1 matvecs.
        pieces = []
        for k in range(n_kernels):
            if k == 0 and exact_thr is not None:
                # sigma=1e-4 exact-match kernel as a VPU threshold (no EUP exp).
                g = jnp.where(jnp.abs(trans - mu[0]) <= exact_thr, 1.0, 0.0)
            else:
                diff = trans - mu[k]
                g = jnp.exp((diff * diff) * c[k])       # c_k = -1/(2 sigma_k^2), host const
            pieces.append(g)
        g_all = jnp.concatenate(pieces, axis=1)         # (Bt, NK*Q, Dt)

        pooled = jax.lax.dot_general(
            g_all, dm,
            dimension_numbers=(((2,), (1,)), ((0,), (0,))),
            precision=jax.lax.Precision.HIGHEST,
            preferred_element_type=jnp.float32,
        )                                               # (Bt, NK*Q, 1)
        pooled_ref[...] += pooled

        @pl.when(d_idx == pl.num_programs(1) - 1)
        def _finalize():
            qm = q_mask_ref[...]                        # (Bt, Q, 1)
            bt, q = qm.shape[0], qm.shape[1]
            pooled_all = pooled_ref[...]                # (Bt, NK*Q, 1)
            acc = jnp.zeros((bt, q, 1), jnp.float32)
            for k in range(n_kernels):
                pk = pooled_all[:, k * q:(k + 1) * q, :]        # (Bt, Q, 1)
                # No clamp before log (matches the PyTorch module).
                acc = acc + w[k] * jnp.log(pk * qm)
            scores = jnp.sum(acc, axis=(1, 2))          # (Bt,)
            out_ref[...] = scores.reshape(1, 1, bt)     # lane-vector score slab

    return kernel


# ----------------------------------------------------------------------------
# Tiling heuristics
# ----------------------------------------------------------------------------
def _vmem_capacity_bytes() -> int:
    try:
        return int(pltpu.get_tpu_info().vmem_capacity_bytes)
    except Exception:
        return 64 * 1024 * 1024      # v7x lower bound; safe on every generation


def _choose_batch_tile(B, Q, Dt, E, NK, batch_tile, budget_bytes):
    # Per-batch-element f32 words: double-buffered input/output blocks + in-kernel
    # temporaries (qn, dn, trans, stacked gaussians incl. concat headroom, pooled).
    blocks = Q * E + Dt * E + Q + Dt + 1
    temps = Q * E + Dt * E + (2 + 2 * NK) * Q * Dt + 2 * NK * Q
    per_elem_bytes = 4 * (2 * blocks + temps)
    cap = max(1, int(budget_bytes) // per_elem_bytes)
    bt = int(max(1, min(batch_tile, cap, B)))
    # v7x has 2 TensorCores: prefer an even number of batch-tile grid steps >= 2
    # so the "parallel" batch axis can shard across both cores (free on v5e/v6e).
    if B >= 2:
        nt_target = 2 * max(1, -(-B // (2 * bt)))
        bt = min(bt, -(-B // nt_target))
    bt = max(1, bt)
    nt = -(-B // bt)
    return bt, nt


def _pad_axis(x, target, axis, mode="edge"):
    cur = x.shape[axis]
    if cur == target:
        return x
    widths = [(0, 0)] * x.ndim
    widths[axis] = (0, target - cur)
    return jnp.pad(x, widths, mode=mode)


# ----------------------------------------------------------------------------
# Wrapper
# ----------------------------------------------------------------------------
def knrm_pallas(q_emb, d_emb, q_mask, d_mask, mu, sigma, fc_w, *,
                batch_tile: int = 128, doc_tile: int = 512,
                exact_match_threshold: bool = True):
    """KNRM forward.

    q_emb: (B, Q, E) f32, d_emb: (B, D, E) f32, q_mask: (B, Q) f32 {0,1},
    d_mask: (B, D) f32 {0,1}, mu/sigma: (NK,), fc_w: (1, NK) or (NK,).
    Returns (B,) f32 scores.
    """
    B, Q, E = q_emb.shape
    _, D, _ = d_emb.shape

    mu_t = tuple(float(x) for x in np.asarray(mu).reshape(-1))
    sig_t = tuple(float(x) for x in np.asarray(sigma).reshape(-1))
    w_t = tuple(float(x) for x in np.asarray(fc_w).reshape(-1))
    NK = len(mu_t)
    c_t = tuple(-1.0 / (2.0 * s * s) for s in sig_t)    # host-side constants (no divides in kernel)

    # Exact-match kernel (mu=1, sigma~1e-4): optionally specialize exp -> threshold
    # at the gaussian's half-height point sigma*sqrt(2 ln 2).
    exact_thr = None
    if exact_match_threshold and sig_t[0] < 1e-3 and abs(mu_t[0] - 1.0) < 1e-6:
        exact_thr = float(sig_t[0] * np.sqrt(2.0 * np.log(2.0)))

    # --- doc-axis chunking (innermost, "arbitrary") ---
    doc_tile = max(8, (int(doc_tile) // 8) * 8)          # sublane-aligned chunk
    if D <= doc_tile:
        Dt, nd, D_pad = D, 1, D
    else:
        Dt = doc_tile
        nd = -(-D // Dt)
        D_pad = nd * Dt

    # --- batch tiling sized against this generation's VMEM ---
    vmem_cap = _vmem_capacity_bytes()
    budget = min(max(int(0.5 * vmem_cap), 8 << 20), 96 << 20)
    vmem_limit = int(min(max(int(0.85 * vmem_cap), 32 << 20), 127 << 20))
    Bt, nt = _choose_batch_tile(B, Q, Dt, E, NK, batch_tile, budget)
    B_pad = nt * Bt

    # Batch padding replicates real rows (finite everywhere); doc padding replicates
    # the last doc embedding (normalization-safe) and zero-extends the doc mask.
    q_emb_p = _pad_axis(q_emb, B_pad, 0)
    d_emb_p = _pad_axis(_pad_axis(d_emb, D_pad, 1), B_pad, 0)
    qm_col = _pad_axis(q_mask.reshape(B, Q, 1), B_pad, 0)
    dm_col = _pad_axis(_pad_axis(d_mask.reshape(B, D, 1), D_pad, 1, mode="constant"),
                       B_pad, 0)

    kernel = _make_knrm_kernel(mu_t, c_t, w_t, NK, exact_thr)

    out = pl.pallas_call(
        kernel,
        out_shape=jax.ShapeDtypeStruct((nt, 1, Bt), jnp.float32),
        grid_spec=pltpu.PrefetchScalarGridSpec(
            num_scalar_prefetch=0,
            grid=(nt, nd),
            in_specs=[
                pl.BlockSpec((Bt, Q, E), lambda b, d: (b, 0, 0)),   # q_emb (const over d)
                pl.BlockSpec((Bt, Dt, E), lambda b, d: (b, d, 0)),  # d_emb chunk
                pl.BlockSpec((Bt, Q, 1), lambda b, d: (b, 0, 0)),   # q_mask column
                pl.BlockSpec((Bt, Dt, 1), lambda b, d: (b, d, 0)),  # d_mask chunk column
            ],
            out_specs=pl.BlockSpec((1, 1, Bt), lambda b, d: (b, 0, 0)),
            scratch_shapes=[pltpu.VMEM((Bt, NK * Q, 1), jnp.float32)],   # pooled accumulator
        ),
        compiler_params=pltpu.CompilerParams(
            dimension_semantics=("parallel", "arbitrary"),
            vmem_limit_bytes=vmem_limit,
        ),
    )(q_emb_p, d_emb_p, qm_col, dm_col)

    return out.reshape(B_pad)[:B]


# ----------------------------------------------------------------------------
# Pure-JAX reference (mirrors the PyTorch forward exactly)
# ----------------------------------------------------------------------------
def knrm_reference(q_emb, d_emb, q_mask, d_mask, mu, sigma, fc_w):
    qn = q_emb / jnp.linalg.norm(q_emb, axis=-1, keepdims=True)
    dn = d_emb / jnp.linalg.norm(d_emb, axis=-1, keepdims=True)
    trans = jnp.einsum("bqe,bde->bqd", qn, dn,
                       precision=jax.lax.Precision.HIGHEST)             # (B,Q,D)
    K = jnp.exp(-(trans[None] - mu.reshape(-1, 1, 1, 1)) ** 2
                / (2.0 * sigma.reshape(-1, 1, 1, 1) ** 2))               # (NK,B,Q,D)
    masked = K * q_mask[None, :, :, None] * d_mask[None, :, None, :]
    summed = jnp.sum(jnp.log(jnp.sum(masked, axis=-1)), axis=-1)         # (NK,B)
    return (fc_w.reshape(1, -1) @ summed)[0]                             # (B,)


# ----------------------------------------------------------------------------
if __name__ == "__main__":
    B, Q, D, E, V, NK = 2, 8, 20, 32, 50, 11

    key = jax.random.PRNGKey(0)
    k_emb, k_q, k_d, k_w = jax.random.split(key, 4)

    # deterministic "word_embeddings" table
    emb_table = jax.random.normal(k_emb, (V, E), dtype=jnp.float32)

    q_tokens = jax.random.randint(k_q, (B, Q), 1, V)          # no pad in query
    d_tokens = jax.random.randint(k_d, (B, D), 0, V)          # may contain pad (0)
    # guarantee every query word has an exact doc match so the exact-match kernel
    # (sigma=1e-4) never yields log(0) = -inf (the module itself would also -inf).
    d_tokens = d_tokens.at[:, :Q].set(q_tokens)

    mu = jnp.asarray(kernel_mus(NK), dtype=jnp.float32)
    sigma = jnp.asarray(kernel_sigmas(NK), dtype=jnp.float32)

    # nn.Linear(n_kernels, 1, bias=False) with xavier_uniform_ init
    bound = float(np.sqrt(6.0 / (NK + 1)))
    fc_w = jax.random.uniform(k_w, (1, NK), jnp.float32, -bound, bound)

    # TODO(synk): the TextFieldEmbedder token->embedding lookup stays in plain JAX (gather).
    q_emb = jnp.take(emb_table, q_tokens, axis=0)             # (B, Q, E)
    d_emb = jnp.take(emb_table, d_tokens, axis=0)             # (B, D, E)
    q_mask = (q_tokens > 0).astype(jnp.float32)               # (B, Q)
    d_mask = (d_tokens > 0).astype(jnp.float32)               # (B, D)

    ref = knrm_reference(q_emb, d_emb, q_mask, d_mask, mu, sigma, fc_w)

    # 1) default config: single doc chunk, merged matvec, exact-match as threshold
    out1 = jax.block_until_ready(
        knrm_pallas(q_emb, d_emb, q_mask, d_mask, mu, sigma, fc_w))
    np.testing.assert_allclose(np.asarray(out1), np.asarray(ref), rtol=1e-2, atol=1e-2)

    # 2) doc-chunked accumulator path (nd=3, incl. doc padding) with the full
    #    gaussian (exp) for the exact-match kernel
    out2 = jax.block_until_ready(
        knrm_pallas(q_emb, d_emb, q_mask, d_mask, mu, sigma, fc_w,
                    batch_tile=2, doc_tile=8, exact_match_threshold=False))
    np.testing.assert_allclose(np.asarray(out2), np.asarray(ref), rtol=1e-2, atol=1e-2)

    print("KERNEL_OK")
</pallas_src>

<mosaic_0001>
module attributes {stable_mosaic.version = 11 : i64} {
  func.func @kernel(%arg0: i32, %arg1: i32, %arg2: memref<1x8x32xf32, #tpu.memory_space<vmem>>, %arg3: memref<1x20x32xf32, #tpu.memory_space<vmem>>, %arg4: memref<1x8x1xf32, #tpu.memory_space<vmem>>, %arg5: memref<1x20x1xf32, #tpu.memory_space<vmem>>, %arg6: memref<1x1x1xf32, #tpu.memory_space<vmem>>, %arg7: memref<1x88x1xf32, #tpu.memory_space<vmem>>) attributes {dimension_semantics = [#tpu.dimension_semantics<parallel>, #tpu.dimension_semantics<arbitrary>], iteration_bounds = array<i64: 2, 1>, scalar_prefetch = 0 : i64, scratch_operands = 1 : i64, tpu.core_type = #tpu.core_type<tc>, window_params = [{transform_indices = @transform_0, window_bounds = array<i64: 1, 8, 32>}, {transform_indices = @transform_1, window_bounds = array<i64: 1, 20, 32>}, {transform_indices = @transform_2, window_bounds = array<i64: 1, 8, 1>}, {transform_indices = @transform_3, window_bounds = array<i64: 1, 20, 1>}, {transform_indices = @transform_4, window_bounds = array<i64: 1, 1, 1>}]} {
    %c0_i32 = arith.constant 0 : i32
    %0 = arith.cmpi eq, %arg1, %c0_i32 : i32
    %1 = arith.extui %0 : i1 to i32
    %c0_i32_0 = arith.constant 0 : i32
    %2 = arith.cmpi ne, %1, %c0_i32_0 : i32
    scf.if %2 {
      %cst_48 = arith.constant 0.000000e+00 : f32
      %109 = vector.broadcast %cst_48 : f32 to vector<1x88x1xf32>
      %c0_49 = arith.constant 0 : index
      %c0_50 = arith.constant 0 : index
      %c0_51 = arith.constant 0 : index
      %110 = vector.load %arg7[%c0_49, %c0_50, %c0_51] : memref<1x88x1xf32, #tpu.memory_space<vmem>>, vector<1x88x1xf32>
      tpu.vector_store %arg7[%c0_49, %c0_50, %c0_51], %109 {strides = array<i32>} : memref<1x88x1xf32, #tpu.memory_space<vmem>>, vector<1x88x1xf32>,
    } else {
    }
    %c0 = arith.constant 0 : index
    %c0_1 = arith.constant 0 : index
    %c0_2 = arith.constant 0 : index
    %3 = vector.load %arg2[%c0, %c0_1, %c0_2] : memref<1x8x32xf32, #tpu.memory_space<vmem>>, vector<1x8x32xf32>
    %c0_3 = arith.constant 0 : index
    %c0_4 = arith.constant 0 : index
    %c0_5 = arith.constant 0 : index
    %4 = vector.load %arg3[%c0_3, %c0_4, %c0_5] : memref<1x20x32xf32, #tpu.memory_space<vmem>>, vector<1x20x32xf32>
    %c0_6 = arith.constant 0 : index
    %c0_7 = arith.constant 0 : index
    %c0_8 = arith.constant 0 : index
    %5 = vector.load %arg5[%c0_6, %c0_7, %c0_8] : memref<1x20x1xf32, #tpu.memory_space<vmem>>, vector<1x20x1xf32>
    %6 = arith.mulf %3, %3 : vector<1x8x32xf32>
    %cst = arith.constant dense<0.000000e+00> : vector<1x8xf32>
    %7 = vector.multi_reduction <add>, %6, %cst [2] : vector<1x8x32xf32> to vector<1x8xf32>
    %8 = vector.shape_cast %7 : vector<1x8xf32> to vector<1x8x1xf32>
    %9 = math.rsqrt %8 : vector<1x8x1xf32>
    %cst_9 = arith.constant 5.000000e-01 : f32
    %10 = vector.broadcast %cst_9 : f32 to vector<1x8x1xf32>
    %11 = arith.mulf %10, %8 : vector<1x8x1xf32>
    %12 = arith.mulf %11, %9 : vector<1x8x1xf32>
    %13 = arith.mulf %12, %9 : vector<1x8x1xf32>
    %cst_10 = arith.constant 1.500000e+00 : f32
    %14 = vector.broadcast %cst_10 : f32 to vector<1x8x1xf32>
    %15 = arith.subf %14, %13 : vector<1x8x1xf32>
    %16 = arith.mulf %9, %15 : vector<1x8x1xf32>
    %17 = vector.broadcast %16 : vector<1x8x1xf32> to vector<1x8x32xf32>
    %18 = arith.mulf %3, %17 : vector<1x8x32xf32>
    %19 = arith.mulf %4, %4 : vector<1x20x32xf32>
    %cst_11 = arith.constant dense<0.000000e+00> : vector<1x20xf32>
    %20 = vector.multi_reduction <add>, %19, %cst_11 [2] : vector<1x20x32xf32> to vector<1x20xf32>
    %21 = vector.shape_cast %20 : vector<1x20xf32> to vector<1x20x1xf32>
    %22 = math.rsqrt %21 : vector<1x20x1xf32>
    %cst_12 = arith.constant 5.000000e-01 : f32
    %23 = vector.broadcast %cst_12 : f32 to vector<1x20x1xf32>
    %24 = arith.mulf %23, %21 : vector<1x20x1xf32>
    %25 = arith.mulf %24, %22 : vector<1x20x1xf32>
    %26 = arith.mulf %25, %22 : vector<1x20x1xf32>
    %cst_13 = arith.constant 1.500000e+00 : f32
    %27 = vector.broadcast %cst_13 : f32 to vector<1x20x1xf32>
    %28 = arith.subf %27, %26 : vector<1x20x1xf32>
    %29 = arith.mulf %22, %28 : vector<1x20x1xf32>
    %30 = vector.broadcast %29 : vector<1x20x1xf32> to vector<1x20x32xf32>
    %31 = arith.mulf %4, %30 : vector<1x20x32xf32>
    %cst_14 = arith.constant dense<0.000000e+00> : vector<1x8x20xf32>
    %32 = tpu.matmul %18, %31, %cst_14 {dimension_numbers = #tpu.dot_dimension_numbers<[2], [2], [1], [1], [0, 0, 0, 1, 1, 1], [0], [0]>, precision = #tpu.contract_precision<fp32>} : vector<1x8x32xf32>, vector<1x20x32xf32>, vector<1x8x20xf32> -> vector<1x8x20xf32>
    %cst_15 = arith.constant 1.000000e+00 : f32
    %33 = vector.broadcast %cst_15 : f32 to vector<1x8x20xf32>
    %34 = arith.subf %32, %33 : vector<1x8x20xf32>
    %35 = math.absf %34 : vector<1x8x20xf32>
    %cst_16 = arith.constant 1.177410e-04 : f32
    %36 = vector.broadcast %cst_16 : f32 to vector<1x8x20xf32>
    %37 = arith.cmpf ole, %35, %36 : vector<1x8x20xf32>
    %cst_17 = arith.constant 1.000000e+00 : f32
    %cst_18 = arith.constant 0.000000e+00 : f32
    %38 = vector.broadcast %cst_17 : f32 to vector<1x8x20xf32>
    %39 = vector.broadcast %cst_18 : f32 to vector<1x8x20xf32>
    %40 = arith.select %37, %38, %39 : vector<1x8x20xi1>, vector<1x8x20xf32>
    %cst_19 = arith.constant 0.899999976 : f32
    %41 = vector.broadcast %cst_19 : f32 to vector<1x8x20xf32>
    %42 = arith.subf %32, %41 : vector<1x8x20xf32>
    %43 = arith.mulf %42, %42 : vector<1x8x20xf32>
    %cst_20 = arith.constant -5.000000e+01 : f32
    %44 = vector.broadcast %cst_20 : f32 to vector<1x8x20xf32>
    %45 = arith.mulf %43, %44 : vector<1x8x20xf32>
    %46 = math.exp %45 : vector<1x8x20xf32>
    %cst_21 = arith.constant 0.699999988 : f32
    %47 = vector.broadcast %cst_21 : f32 to vector<1x8x20xf32>
    %48 = arith.subf %32, %47 : vector<1x8x20xf32>
    %49 = arith.mulf %48, %48 : vector<1x8x20xf32>
    %cst_22 = arith.constant -5.000000e+01 : f32
    %50 = vector.broadcast %cst_22 : f32 to vector<1x8x20xf32>
    %51 = arith.mulf %49, %50 : vector<1x8x20xf32>
    %52 = math.exp %51 : vector<1x8x20xf32>
    %cst_23 = arith.constant 5.000000e-01 : f32
    %53 = vector.broadcast %cst_23 : f32 to vector<1x8x20xf32>
    %54 = arith.subf %32, %53 : vector<1x8x20xf32>
    %55 = arith.mulf %54, %54 : vector<1x8x20xf32>
    %cst_24 = arith.constant -5.000000e+01 : f32
    %56 = vector.broadcast %cst_24 : f32 to vector<1x8x20xf32>
    %57 = arith.mulf %55, %56 : vector<1x8x20xf32>
    %58 = math.exp %57 : vector<1x8x20xf32>
    %cst_25 = arith.constant 3.000000e-01 : f32
    %59 = vector.broadcast %cst_25 : f32 to vector<1x8x20xf32>
    %60 = arith.subf %32, %59 : vector<1x8x20xf32>
    %61 = arith.mulf %60, %60 : vector<1x8x20xf32>
    %cst_26 = arith.constant -5.000000e+01 : f32
    %62 = vector.broadcast %cst_26 : f32 to vector<1x8x20xf32>
    %63 = arith.mulf %61, %62 : vector<1x8x20xf32>
    %64 = math.exp %63 : vector<1x8x20xf32>
    %cst_27 = arith.constant 1.000000e-01 : f32
    %65 = vector.broadcast %cst_27 : f32 to vector<1x8x20xf32>
    %66 = arith.subf %32, %65 : vector<1x8x20xf32>
    %67 = arith.mulf %66, %66 : vector<1x8x20xf32>
    %cst_28 = arith.constant -5.000000e+01 : f32
    %68 = vector.broadcast %cst_28 : f32 to vector<1x8x20xf32>
    %69 = arith.mulf %67, %68 : vector<1x8x20xf32>
    %70 = math.exp %69 : vector<1x8x20xf32>
    %cst_29 = arith.constant -1.000000e-01 : f32
    %71 = vector.broadcast %cst_29 : f32 to vector<1x8x20xf32>
    %72 = arith.subf %32, %71 : vector<1x8x20xf32>
    %73 = arith.mulf %72, %72 : vector<1x8x20xf32>
    %cst_30 = arith.constant -5.000000e+01 : f32
    %74 = vector.broadcast %cst_30 : f32 to vector<1x8x20xf32>
    %75 = arith.mulf %73, %74 : vector<1x8x20xf32>
    %76 = math.exp %75 : vector<1x8x20xf32>
    %cst_31 = arith.constant -3.000000e-01 : f32
    %77 = vector.broadcast %cst_31 : f32 to vector<1x8x20xf32>
    %78 = arith.subf %32, %77 : vector<1x8x20xf32>
    %79 = arith.mulf %78, %78 : vector<1x8x20xf32>
    %cst_32 = arith.constant -5.000000e+01 : f32
    %80 = vector.broadcast %cst_32 : f32 to vector<1x8x20xf32>
    %81 = arith.mulf %79, %80 : vector<1x8x20xf32>
    %82 = math.exp %81 : vector<1x8x20xf32>
    %cst_33 = arith.constant -5.000000e-01 : f32
    %83 = vector.broadcast %cst_33 : f32 to vector<1x8x20xf32>
    %84 = arith.subf %32, %83 : vector<1x8x20xf32>
    %85 = arith.mulf %84, %84 : vector<1x8x20xf32>
    %cst_34 = arith.constant -5.000000e+01 : f32
    %86 = vector.broadcast %cst_34 : f32 to vector<1x8x20xf32>
    %87 = arith.mulf %85, %86 : vector<1x8x20xf32>
    %88 = math.exp %87 : vector<1x8x20xf32>
    %cst_35 = arith.constant -0.699999988 : f32
    %89 = vector.broadcast %cst_35 : f32 to vector<1x8x20xf32>
    %90 = arith.subf %32, %89 : vector<1x8x20xf32>
    %91 = arith.mulf %90, %90 : vector<1x8x20xf32>
    %cst_36 = arith.constant -5.000000e+01 : f32
    %92 = vector.broadcast %cst_36 : f32 to vector<1x8x20xf32>
    %93 = arith.mulf %91, %92 : vector<1x8x20xf32>
    %94 = math.exp %93 : vector<1x8x20xf32>
    %cst_37 = arith.constant -0.899999976 : f32
    %95 = vector.broadcast %cst_37 : f32 to vector<1x8x20xf32>
    %96 = arith.subf %32, %95 : vector<1x8x20xf32>
    %97 = arith.mulf %96, %96 : vector<1x8x20xf32>
    %cst_38 = arith.constant -5.000000e+01 : f32
    %98 = vector.broadcast %cst_38 : f32 to vector<1x8x20xf32>
    %99 = arith.mulf %97, %98 : vector<1x8x20xf32>
    %100 = math.exp %99 : vector<1x8x20xf32>
    %101 = tpu.concatenate %40, %46, %52, %58, %64, %70, %76, %82, %88, %94, %100 in 1 : vector<1x8x20xf32>, vector<1x8x20xf32>, vector<1x8x20xf32>, vector<1x8x20xf32>, vector<1x8x20xf32>, vector<1x8x20xf32>, vector<1x8x20xf32>, vector<1x8x20xf32>, vector<1x8x20xf32>, vector<1x8x20xf32>, vector<1x8x20xf32> -> vector<1x88x20xf32>
    %cst_39 = arith.constant dense<0.000000e+00> : vector<1x88x1xf32>
    %102 = tpu.matmul %101, %5, %cst_39 {dimension_numbers = #tpu.dot_dimension_numbers<[2], [1], [1], [2], [0, 0, 0, 1, 1, 2], [0], [0]>, precision = #tpu.contract_precision<fp32>} : vector<1x88x20xf32>, vector<1x20x1xf32>, vector<1x88x1xf32> -> vector<1x88x1xf32>
    %c0_40 = arith.constant 0 : index
    %c0_41 = arith.constant 0 : index
    %c0_42 = arith.constant 0 : index
    %103 = vector.load %arg7[%c0_40, %c0_41, %c0_42] : memref<1x88x1xf32, #tpu.memory_space<vmem>>, vector<1x88x1xf32>
    %104 = arith.addf %103, %102 : vector<1x88x1xf32>
    %c0_43 = arith.constant 0 : index
    %c0_44 = arith.constant 0 : index
    %c0_45 = arith.constant 0 : index
    %105 = vector.load %arg7[%c0_43, %c0_44, %c0_45] : memref<1x88x1xf32, #tpu.memory_space<vmem>>, vector<1x88x1xf32>
    tpu.vector_store %arg7[%c0_43, %c0_44, %c0_45], %104 {strides = array<i32>} : memref<1x88x1xf32, #tpu.memory_space<vmem>>, vector<1x88x1xf32>,
    %c0_i32_46 = arith.constant 0 : i32
    %106 = arith.cmpi eq, %arg1, %c0_i32_46 : i32
    %107 = arith.extui %106 : i1 to i32
    %c0_i32_47 = arith.constant 0 : i32
    %108 = arith.cmpi ne, %107, %c0_i32_47 : i32
    scf.if %108 {
      %c0_48 = arith.constant 0 : index
      %c0_49 = arith.constant 0 : index
      %c0_50 = arith.constant 0 : index
      %109 = vector.load %arg4[%c0_48, %c0_49, %c0_50] : memref<1x8x1xf32, #tpu.memory_space<vmem>>, vector<1x8x1xf32>
      %c0_51 = arith.constant 0 : index
      %c0_52 = arith.constant 0 : index
      %c0_53 = arith.constant 0 : index
      %110 = vector.load %arg7[%c0_51, %c0_52, %c0_53] : memref<1x88x1xf32, #tpu.memory_space<vmem>>, vector<1x88x1xf32>
      %cst_54 = arith.constant 0.000000e+00 : f32
      %111 = vector.broadcast %cst_54 : f32 to vector<1x8x1xf32>
      %112 = vector.extract_strided_slice %110 {offsets = [0, 0, 0], sizes = [1, 8, 1], strides = [1, 1, 1]} : vector<1x88x1xf32> to vector<1x8x1xf32>
      %113 = arith.mulf %112, %109 : vector<1x8x1xf32>
      %114 = math.log %113 : vector<1x8x1xf32>
      %cst_55 = arith.constant -0.329526633 : f32
      %115 = vector.broadcast %cst_55 : f32 to vector<1x8x1xf32>
      %116 = arith.mulf %115, %114 : vector<1x8x1xf32>
      %117 = arith.addf %111, %116 : vector<1x8x1xf32>
      %118 = vector.extract_strided_slice %110 {offsets = [0, 8, 0], sizes = [1, 8, 1], strides = [1, 1, 1]} : vector<1x88x1xf32> to vector<1x8x1xf32>
      %119 = arith.mulf %118, %109 : vector<1x8x1xf32>
      %120 = math.log %119 : vector<1x8x1xf32>
      %cst_56 = arith.constant 0.330855459 : f32
      %121 = vector.broadcast %cst_56 : f32 to vector<1x8x1xf32>
      %122 = arith.mulf %121, %120 : vector<1x8x1xf32>
      %123 = arith.addf %117, %122 : vector<1x8x1xf32>
      %124 = vector.extract_strided_slice %110 {offsets = [0, 16, 0], sizes = [1, 8, 1], strides = [1, 1, 1]} : vector<1x88x1xf32> to vector<1x8x1xf32>
      %125 = arith.mulf %124, %109 : vector<1x8x1xf32>
      %126 = math.log %125 : vector<1x8x1xf32>
      %cst_57 = arith.constant 0.641661286 : f32
      %127 = vector.broadcast %cst_57 : f32 to vector<1x8x1xf32>
      %128 = arith.mulf %127, %126 : vector<1x8x1xf32>
      %129 = arith.addf %123, %128 : vector<1x8x1xf32>
      %130 = vector.extract_strided_slice %110 {offsets = [0, 24, 0], sizes = [1, 8, 1], strides = [1, 1, 1]} : vector<1x88x1xf32> to vector<1x8x1xf32>
      %131 = arith.mulf %130, %109 : vector<1x8x1xf32>
      %132 = math.log %131 : vector<1x8x1xf32>
      %cst_58 = arith.constant -0.410770267 : f32
      %133 = vector.broadcast %cst_58 : f32 to vector<1x8x1xf32>
      %134 = arith.mulf %133, %132 : vector<1x8x1xf32>
      %135 = arith.addf %129, %134 : vector<1x8x1xf32>
      %136 = vector.extract_strided_slice %110 {offsets = [0, 32, 0], sizes = [1, 8, 1], strides = [1, 1, 1]} : vector<1x88x1xf32> to vector<1x8x1xf32>
      %137 = arith.mulf %136, %109 : vector<1x8x1xf32>
      %138 = math.log %137 : vector<1x8x1xf32>
      %cst_59 = arith.constant -0.694399476 : f32
      %139 = vector.broadcast %cst_59 : f32 to vector<1x8x1xf32>
      %140 = arith.mulf %139, %138 : vector<1x8x1xf32>
      %141 = arith.addf %135, %140 : vector<1x8x1xf32>
      %142 = vector.extract_strided_slice %110 {offsets = [0, 40, 0], sizes = [1, 8, 1], strides = [1, 1, 1]} : vector<1x88x1xf32> to vector<1x8x1xf32>
      %143 = arith.mulf %142, %109 : vector<1x8x1xf32>
      %144 = math.log %143 : vector<1x8x1xf32>
      %cst_60 = arith.constant 0.445278257 : f32
      %145 = vector.broadcast %cst_60 : f32 to vector<1x8x1xf32>
      %146 = arith.mulf %145, %144 : vector<1x8x1xf32>
      %147 = arith.addf %141, %146 : vector<1x8x1xf32>
      %148 = vector.extract_strided_slice %110 {offsets = [0, 48, 0], sizes = [1, 8, 1], strides = [1, 1, 1]} : vector<1x88x1xf32> to vector<1x8x1xf32>
      %149 = arith.mulf %148, %109 : vector<1x8x1xf32>
      %150 = math.log %149 : vector<1x8x1xf32>
      %cst_61 = arith.constant 0.605622708 : f32
      %151 = vector.broadcast %cst_61 : f32 to vector<1x8x1xf32>
      %152 = arith.mulf %151, %150 : vector<1x8x1xf32>
      %153 = arith.addf %147, %152 : vector<1x8x1xf32>
      %154 = vector.extract_strided_slice %110 {offsets = [0, 56, 0], sizes = [1, 8, 1], strides = [1, 1, 1]} : vector<1x88x1xf32> to vector<1x8x1xf32>
      %155 = arith.mulf %154, %109 : vector<1x8x1xf32>
      %156 = math.log %155 : vector<1x8x1xf32>
      %cst_62 = arith.constant -0.317144394 : f32
      %157 = vector.broadcast %cst_62 : f32 to vector<1x8x1xf32>
      %158 = arith.mulf %157, %156 : vector<1x8x1xf32>
      %159 = arith.addf %153, %158 : vector<1x8x1xf32>
      %160 = vector.extract_strided_slice %110 {offsets = [0, 64, 0], sizes = [1, 8, 1], strides = [1, 1, 1]} : vector<1x88x1xf32> to vector<1x8x1xf32>
      %161 = arith.mulf %160, %109 : vector<1x8x1xf32>
      %162 = math.log %161 : vector<1x8x1xf32>
      %cst_63 = arith.constant 0.546895623 : f32
      %163 = vector.broadcast %cst_63 : f32 to vector<1x8x1xf32>
      %164 = arith.mulf %163, %162 : vector<1x8x1xf32>
      %165 = arith.addf %159, %164 : vector<1x8x1xf32>
      %166 = vector.extract_strided_slice %110 {offsets = [0, 72, 0], sizes = [1, 8, 1], strides = [1, 1, 1]} : vector<1x88x1xf32> to vector<1x8x1xf32>
      %167 = arith.mulf %166, %109 : vector<1x8x1xf32>
      %168 = math.log %167 : vector<1x8x1xf32>
      %cst_64 = arith.constant 0.608104646 : f32
      %169 = vector.broadcast %cst_64 : f32 to vector<1x8x1xf32>
      %170 = arith.mulf %169, %168 : vector<1x8x1xf32>
      %171 = arith.addf %165, %170 : vector<1x8x1xf32>
      %172 = vector.extract_strided_slice %110 {offsets = [0, 80, 0], sizes = [1, 8, 1], strides = [1, 1, 1]} : vector<1x88x1xf32> to vector<1x8x1xf32>
      %173 = arith.mulf %172, %109 : vector<1x8x1xf32>
      %174 = math.log %173 : vector<1x8x1xf32>
      %cst_65 = arith.constant -0.649750292 : f32
      %175 = vector.broadcast %cst_65 : f32 to vector<1x8x1xf32>
      %176 = arith.mulf %175, %174 : vector<1x8x1xf32>
      %177 = arith.addf %171, %176 : vector<1x8x1xf32>
      %cst_66 = arith.constant dense<0.000000e+00> : vector<1xf32>
      %178 = vector.multi_reduction <add>, %177, %cst_66 [1, 2] : vector<1x8x1xf32> to vector<1xf32>
      %179 = vector.shape_cast %178 : vector<1xf32> to vector<1x1x1xf32>
      %c0_67 = arith.constant 0 : index
      %c0_68 = arith.constant 0 : index
      %c0_69 = arith.constant 0 : index
      %180 = vector.load %arg6[%c0_67, %c0_68, %c0_69] : memref<1x1x1xf32, #tpu.memory_space<vmem>>, vector<1x1x1xf32>
      tpu.vector_store %arg6[%c0_67, %c0_68, %c0_69], %179 {strides = array<i32>} : memref<1x1x1xf32, #tpu.memory_space<vmem>>, vector<1x1x1xf32>,
    } else {
    }
    return
  }
  func.func @transform_0(%arg0: i32, %arg1: i32) -> (i32, i32, i32) {
    %c0_i32 = arith.constant 0 : i32
    %c0_i32_0 = arith.constant 0 : i32
    %c0_i32_1 = arith.constant 0 : i32
    return %arg0, %c0_i32, %c0_i32_0 : i32, i32, i32
  }
  func.func @transform_1(%arg0: i32, %arg1: i32) -> (i32, i32, i32) {
    %c0_i32 = arith.constant 0 : i32
    %c0_i32_0 = arith.constant 0 : i32
    return %arg0, %arg1, %c0_i32 : i32, i32, i32
  }
  func.func @transform_2(%arg0: i32, %arg1: i32) -> (i32, i32, i32) {
    %c0_i32 = arith.constant 0 : i32
    %c0_i32_0 = arith.constant 0 : i32
    %c0_i32_1 = arith.constant 0 : i32
    return %arg0, %c0_i32, %c0_i32_0 : i32, i32, i32
  }
  func.func @transform_3(%arg0: i32, %arg1: i32) -> (i32, i32, i32) {
    %c0_i32 = arith.constant 0 : i32
    %c0_i32_0 = arith.constant 0 : i32
    return %arg0, %arg1, %c0_i32 : i32, i32, i32
  }
  func.func @transform_4(%arg0: i32, %arg1: i32) -> (i32, i32, i32) {
    %c0_i32 = arith.constant 0 : i32
    %c0_i32_0 = arith.constant 0 : i32
    %c0_i32_1 = arith.constant 0 : i32
    return %arg0, %c0_i32, %c0_i32_0 : i32, i32, i32
  }
}

</mosaic_0001>

<llo_original>
// kernel: tpu_custom_call.1
$region0: #{tpu_custom_call.1}
  #allocation0 [shape = 'u32[]', space=smem, size = 0x4, offset = 0x4, fixed_abs, tag = 'smem constant byte address 0x4 - core index']
  #allocation1 [shape = 'u32[144,128]{1,0:T(1,128)}', space=vmem, size = 0x12000, scoped, tag = 'internal scratch']
  #allocation2 [shape = 'f32[1,88,1]{2,1,0:T(8,128)}', space=vmem, size = 0xb000, scoped, tag = 'scratch operand']
  %s0 = inlined_call_operand.vmem [shape: f32[2,8,32], index: 0, kind: input, shape index: {}]
  %s1 = inlined_call_operand.vmem [shape: f32[2,20,32], index: 1, kind: input, shape index: {}]
  %s2 = inlined_call_operand.vmem [shape: f32[2,8,1], index: 2, kind: input, shape index: {}]
  %s3 = inlined_call_operand.vmem [shape: f32[2,20,1], index: 3, kind: input, shape index: {}]
  %s4 = inlined_call_operand.vmem [shape: f32[2,1,1], index: 4, kind: output, shape index: {}]
  %s5 = sld [smem:[#allocation0]]
  $region57: #{tpu_custom_call.1} parent=0
    _
  %s7 = ssub.s32 1, %s5
  %s8 = scalar_select 0, %s7, %s5
  loop: start=0, step=1, limit=4
  $region2: #{tpu_custom_call.1} parent=0 // loop_pre_header
    _
  $region3: #{tpu_custom_call.1} parent=0 // loop_header
    %s10 = sphi 0, %s14
    %p11 = scmp.ge.s32.totalorder %s10, 4
    %s17 = sphi 0, %s29
    %s18 = sphi 0, %s25
    %s19 = sphi 0, %s17
    %s20 = sphi 0, %s18
    %s21 = sphi 0, %s19
    %s22 = sphi 0, %s20
    %s32 = sphi 0, %s34
    %s35 = sphi 0, %s32
    %s36 = sphi 0, %s35
    %s52 = sphi 0, %s36
    %s60 = sphi 0, %s62
    %s63 = sphi 0, %s60
    %s64 = sphi 0, %s63
    %s80 = sphi 0, %s64
    %s86 = sphi 0, %s88
    %s89 = sphi 0, %s86
    %s90 = sphi 0, %s89
    %s106 = sphi 0, %s90
    %s114 = sphi 0, %s116
    %s117 = sphi 0, %s114
    %s118 = sphi 0, %s117
    %s134 = sphi 0, %s118
    %s140 = sphi 0, %s142
    %s143 = sphi 0, %s140
    %s144 = sphi 0, %s143
    %s160 = sphi 0, %s144
  $region4: #{tpu_custom_call.1} parent=0 // loop_header_branch
    %13 = sbr.rel (%p11) target = $region8
  $region5: #{tpu_custom_call.1} parent=0 // loop_body
    %s15 = ssub.s32 %s10, 1
    %s16 = ssub.s32 %s10, 2
    %s23 = sadd.s32 1, %s18
    %p24 = scmp.ge.s32.totalorder %s23, 1
    %s25 = scalar_select %p24, 0, %s23
    %s26 = sadd.s32 1, %s17
    %s27 = scalar_select %p24, %s26, %s17
    %p28 = scmp.ge.s32.totalorder %s27, 2
    %s29 = scalar_select %p28, 0, %s27
    %s30 = ssub.s32 %s17, %s29
    %p31 = scmp.eq.s32.totalorder %s30, 0
    %s33 = sadd.s32 %s32, 1
    %s34 = scalar_select %p31, %s32, %s33
    %p37 = pneg %p31
    %p38 = scmp.eq.s32.totalorder %s10, 1
    %p39 = por %p37, %p38
    %p40 = scmp.ne.s32.totalorder %s32, %s35
    %p41 = scmp.eq.s32.totalorder %s10, 0
    %p42 = por %p40, %p41
    %p43 = scmp.ne.s32.totalorder %s32, %s35
    %p44 = scmp.eq.s32.totalorder %s15, 1
    %p45 = por %p43, %p44
    %p46 = scmp.ne.s32.totalorder %s35, %s36
    %p47 = scmp.eq.s32.totalorder %s15, 0
    %p48 = por %p46, %p47
    %p49 = scmp.ne.s32.totalorder %s35, %s36
    %p50 = scmp.eq.s32.totalorder %s16, 1
    %p51 = por %p49, %p50
    %p53 = scmp.ne.s32.totalorder %s36, %s52
    %p54 = scmp.eq.s32.totalorder %s16, 0
    %p55 = por %p53, %p54
    %s56 = ssub.s32 %s17, %s29
    %s57 = ssub.s32 %s18, %s25
    %s58 = sor.u32 %s56, %s57
    %p59 = scmp.eq.s32.totalorder %s58, 0
    %s61 = sadd.s32 %s60, 1
    %s62 = scalar_select %p59, %s60, %s61
    %p65 = pneg %p59
    %p66 = scmp.eq.s32.totalorder %s10, 1
    %p67 = por %p65, %p66
    %p68 = scmp.ne.s32.totalorder %s60, %s63
    %p69 = scmp.eq.s32.totalorder %s10, 0
    %p70 = por %p68, %p69
    %p71 = scmp.ne.s32.totalorder %s60, %s63
    %p72 = scmp.eq.s32.totalorder %s15, 1
    %p73 = por %p71, %p72
    %p74 = scmp.ne.s32.totalorder %s63, %s64
    %p75 = scmp.eq.s32.totalorder %s15, 0
    %p76 = por %p74, %p75
    %p77 = scmp.ne.s32.totalorder %s63, %s64
    %p78 = scmp.eq.s32.totalorder %s16, 1
    %p79 = por %p77, %p78
    %p81 = scmp.ne.s32.totalorder %s64, %s80
    %p82 = scmp.eq.s32.totalorder %s16, 0
    %p83 = por %p81, %p82
    %s84 = ssub.s32 %s17, %s29
    %p85 = scmp.eq.s32.totalorder %s84, 0
    %s87 = sadd.s32 %s86, 1
    %s88 = scalar_select %p85, %s86, %s87
    %p91 = pneg %p85
    %p92 = scmp.eq.s32.totalorder %s10, 1
    %p93 = por %p91, %p92
    %p94 = scmp.ne.s32.totalorder %s86, %s89
    %p95 = scmp.eq.s32.totalorder %s10, 0
    %p96 = por %p94, %p95
    %p97 = scmp.ne.s32.totalorder %s86, %s89
    %p98 = scmp.eq.s32.totalorder %s15, 1
    %p99 = por %p97, %p98
    %p100 = scmp.ne.s32.totalorder %s89, %s90
    %p101 = scmp.eq.s32.totalorder %s15, 0
    %p102 = por %p100, %p101
    %p103 = scmp.ne.s32.totalorder %s89, %s90
    %p104 = scmp.eq.s32.totalorder %s16, 1
    %p105 = por %p103, %p104
    %p107 = scmp.ne.s32.totalorder %s90, %s106
    %p108 = scmp.eq.s32.totalorder %s16, 0
    %p109 = por %p107, %p108
    %s110 = ssub.s32 %s17, %s29
    %s111 = ssub.s32 %s18, %s25
    %s112 = sor.u32 %s110, %s111
    %p113 = scmp.eq.s32.totalorder %s112, 0
    %s115 = sadd.s32 %s114, 1
    %s116 = scalar_select %p113, %s114, %s115
    %p119 = pneg %p113
    %p120 = scmp.eq.s32.totalorder %s10, 1
    %p121 = por %p119, %p120
    %p122 = scmp.ne.s32.totalorder %s114, %s117
    %p123 = scmp.eq.s32.totalorder %s10, 0
    %p124 = por %p122, %p123
    %p125 = scmp.ne.s32.totalorder %s114, %s117
    %p126 = scmp.eq.s32.totalorder %s15, 1
    %p127 = por %p125, %p126
    %p128 = scmp.ne.s32.totalorder %s117, %s118
    %p129 = scmp.eq.s32.totalorder %s15, 0
    %p130 = por %p128, %p129
    %p131 = scmp.ne.s32.totalorder %s117, %s118
    %p132 = scmp.eq.s32.totalorder %s16, 1
    %p133 = por %p131, %p132
    %p135 = scmp.ne.s32.totalorder %s118, %s134
    %p136 = scmp.eq.s32.totalorder %s16, 0
    %p137 = por %p135, %p136
    %s138 = ssub.s32 %s17, %s29
    %p139 = scmp.eq.s32.totalorder %s138, 0
    %s141 = sadd.s32 %s140, 1
    %s142 = scalar_select %p139, %s140, %s141
    %p145 = pneg %p139
    %p146 = scmp.eq.s32.totalorder %s10, 1
    %p147 = por %p145, %p146
    %p148 = scmp.ne.s32.totalorder %s140, %s143
    %p149 = scmp.eq.s32.totalorder %s10, 0
    %p150 = por %p148, %p149
    %p151 = scmp.ne.s32.totalorder %s140, %s143
    %p152 = scmp.eq.s32.totalorder %s15, 1
    %p153 = por %p151, %p152
    %p154 = scmp.ne.s32.totalorder %s143, %s144
    %p155 = scmp.eq.s32.totalorder %s15, 0
    %p156 = por %p154, %p155
    %p157 = scmp.ne.s32.totalorder %s143, %s144
    %p158 = scmp.eq.s32.totalorder %s16, 1
    %p159 = por %p157, %p158
    %p161 = scmp.ne.s32.totalorder %s144, %s160
    %p162 = scmp.eq.s32.totalorder %s16, 0
    %p163 = por %p161, %p162
    %p164 = scmp.le.s32.totalorder 1, %s10
    %p165 = scmp.lt.s32.totalorder %s10, 3
    %p166 = pnand %p164, %p165
    %p167 = pneg %p166
    // Predicated region
    $region9: #{tpu_custom_call.1} parent=5 // pred_check
      _
    $region10: #{tpu_custom_call.1} parent=5 // pred_check_branch
      %169 = sbr.rel (%p166) target = $region12
    $region11: #{tpu_custom_call.1} parent=5 // pred_region
      %s170 = ssub.s32 %s10, 1
    $region12: #{tpu_custom_call.1} parent=5 // pred_fallthru
      _
    %p171 = scmp.lt.s32.totalorder %s10, 2
    // Predicated region
    $region13: #{tpu_custom_call.1} parent=5 // pred_check
      %p172 = pneg %p171
    $region14: #{tpu_custom_call.1} parent=5 // pred_check_branch
      %174 = sbr.rel (%p172) target = $region16
    $region15: #{tpu_custom_call.1} parent=5 // pred_region
      // Predicated region
      $region17: #{tpu_custom_call.1} parent=15 // pred_check
        %p175 = pneg %p42
      $region18: #{tpu_custom_call.1} parent=15 // pred_check_branch
        %177 = sbr.rel (%p175) target = $region20
      $region19: #{tpu_custom_call.1} parent=15 // pred_region
        %p178 = scmp.lt.s32.totalorder %s17, 1
        %s179 = scalar_select %p178, %s17, 1
        %s180 = smul.addr %s179, 8
        %s181 = scalar_lea.vmem %s0, %s180
      $region20: #{tpu_custom_call.1} parent=15 // pred_fallthru
        _
      // Predicated region
      $region21: #{tpu_custom_call.1} parent=15 // pred_check
        %p182 = pneg %p70
      $region22: #{tpu_custom_call.1} parent=15 // pred_check_branch
        %184 = sbr.rel (%p182) target = $region24
      $region23: #{tpu_custom_call.1} parent=15 // pred_region
        %s185 = smul.u32 3, %s18
        %p186 = scmp.lt.s32.totalorder %s17, 1
        %s187 = scalar_select %p186, %s17, 1
        %p188 = scmp.lt.s32.totalorder %s185, 2
        %s189 = scalar_select %p188, %s185, 2
        %s190 = smul.addr %s187, 3
        %s191 = sadd.s32 %s189, %s190
        %s192 = smul.addr %s191, 8
        %s193 = scalar_lea.vmem %s1, %s192
        %s194 = smul.u32 3, %s18
      $region24: #{tpu_custom_call.1} parent=15 // pred_fallthru
        _
      // Predicated region
      $region25: #{tpu_custom_call.1} parent=15 // pred_check
        %p195 = pneg %p96
      $region26: #{tpu_custom_call.1} parent=15 // pred_check_branch
        %197 = sbr.rel (%p195) target = $region28
      $region27: #{tpu_custom_call.1} parent=15 // pred_region
        %p198 = scmp.lt.s32.totalorder %s17, 1
        %s199 = scalar_select %p198, %s17, 1
        %s200 = smul.addr %s199, 8
        %s201 = scalar_lea.vmem %s2, %s200
      $region28: #{tpu_custom_call.1} parent=15 // pred_fallthru
        _
      // Predicated region
      $region29: #{tpu_custom_call.1} parent=15 // pred_check
        %p202 = pneg %p124
      $region30: #{tpu_custom_call.1} parent=15 // pred_check_branch
        %204 = sbr.rel (%p202) target = $region32
      $region31: #{tpu_custom_call.1} parent=15 // pred_region
        %s205 = smul.u32 3, %s18
        %p206 = scmp.lt.s32.totalorder %s17, 1
        %s207 = scalar_select %p206, %s17, 1
        %p208 = scmp.lt.s32.totalorder %s205, 2
        %s209 = scalar_select %p208, %s205, 2
        %s210 = smul.addr %s207, 3
        %s211 = sadd.s32 %s209, %s210
        %s212 = smul.addr %s211, 8
        %s213 = scalar_lea.vmem %s3, %s212
        %s214 = smul.u32 3, %s18
      $region32: #{tpu_custom_call.1} parent=15 // pred_fallthru
        _
    $region16: #{tpu_custom_call.1} parent=5 // pred_fallthru
      _
    %p215 = scmp.le.s32.totalorder 1, %s10
    %p216 = scmp.lt.s32.totalorder %s10, 3
    %p217 = pnand %p215, %p216
    %p218 = pneg %p217
    // Predicated region
    $region33: #{tpu_custom_call.1} parent=5 // pred_check
      _
    $region34: #{tpu_custom_call.1} parent=5 // pred_check_branch
      %220 = sbr.rel (%p217) target = $region36
    $region35: #{tpu_custom_call.1} parent=5 // pred_region
      %s221 = ssub.s32 %s10, 1
      %p222 = scmp.lt.s32.totalorder %s19, 1
      %s223 = scalar_select %p222, %s19, 1
      %s224 = smul.addr %s223, 8
      %s225 = scalar_lea.vmem %s0, %s224
      %p226 = pneg %p48
      %p227 = pneg %p45
      %s228 = smul.u32 3, %s20
      %p229 = scmp.lt.s32.totalorder %s19, 1
      %s230 = scalar_select %p229, %s19, 1
      %p231 = scmp.lt.s32.totalorder %s228, 2
      %s232 = scalar_select %p231, %s228, 2
      %s233 = smul.addr %s230, 3
      %s234 = sadd.s32 %s232, %s233
      %s235 = smul.addr %s234, 8
      %s236 = scalar_lea.vmem %s1, %s235
      %p237 = pneg %p76
      %p238 = pneg %p73
      %p239 = scmp.lt.s32.totalorder %s19, 1
      %s240 = scalar_select %p239, %s19, 1
      %s241 = smul.addr %s240, 8
      %s242 = scalar_lea.vmem %s2, %s241
      %p243 = pneg %p102
      %p244 = pneg %p99
      %s245 = smul.u32 3, %s20
      %p246 = scmp.lt.s32.totalorder %s19, 1
      %s247 = scalar_select %p246, %s19, 1
      %p248 = scmp.lt.s32.totalorder %s245, 2
      %s249 = scalar_select %p248, %s245, 2
      %s250 = smul.addr %s247, 3
      %s251 = sadd.s32 %s249, %s250
      %s252 = smul.addr %s251, 8
      %s253 = scalar_lea.vmem %s3, %s252
      %p254 = pneg %p130
      %p255 = pneg %p127
      %p256 = pneg %p156
      %p257 = pneg %p153
      %p258 = scmp.lt.s32.totalorder %s19, 1
      %s259 = scalar_select %p258, %s19, 1
      %s260 = scalar_lea.vmem %s4, %s259
      %p261 = scmp.lt.s32.totalorder %s19, 1
      %s262 = scalar_select %p261, %s19, 1
      %s263 = smul.addr %s262, 8
      %s264 = scalar_lea.vmem %s0, %s263
      %s265 = smul.u32 3, %s20
      %p266 = scmp.lt.s32.totalorder %s19, 1
      %s267 = scalar_select %p266, %s19, 1
      %p268 = scmp.lt.s32.totalorder %s265, 2
      %s269 = scalar_select %p268, %s265, 2
      %s270 = smul.addr %s267, 3
      %s271 = sadd.s32 %s269, %s270
      %s272 = smul.addr %s271, 8
      %s273 = scalar_lea.vmem %s1, %s272
      %s274 = smul.u32 3, %s20
      %p275 = scmp.lt.s32.totalorder %s19, 1
      %s276 = scalar_select %p275, %s19, 1
      %s277 = smul.addr %s276, 8
      %s278 = scalar_lea.vmem %s2, %s277
      %s279 = smul.u32 3, %s20
      %p280 = scmp.lt.s32.totalorder %s19, 1
      %s281 = scalar_select %p280, %s19, 1
      %p282 = scmp.lt.s32.totalorder %s279, 2
      %s283 = scalar_select %p282, %s279, 2
      %s284 = smul.addr %s281, 3
      %s285 = sadd.s32 %s283, %s284
      %s286 = smul.addr %s285, 8
      %s287 = scalar_lea.vmem %s3, %s286
      %s288 = smul.u32 3, %s20
      %p289 = scmp.lt.s32.totalorder %s19, 1
      %s290 = scalar_select %p289, %s19, 1
      %s291 = scalar_lea.vmem %s4, %s290
      %p292 = scmp.eq.s32.totalorder %s20, 0
      // Predicated region
      $region37: #{tpu_custom_call.1} parent=35 // pred_check
        %p293 = pneg %p292
      $region38: #{tpu_custom_call.1} parent=35 // pred_check_branch
        %295 = sbr.rel (%p293) target = $region40
      $region39: #{tpu_custom_call.1} parent=35 // pred_region
        %vm296 = vcmask 7168
        %297 = vst.msk [vmem:[#allocation2] sm:$0xff] %vm296, 0.0
        %298 = vst.msk [vmem:[#allocation2 + $0x8] sm:$0xff] %vm296, 0.0
        %299 = vst.msk [vmem:[#allocation2 + $0x10] sm:$0xff] %vm296, 0.0
        %300 = vst.msk [vmem:[#allocation2 + $0x18] sm:$0xff] %vm296, 0.0
        %301 = vst.msk [vmem:[#allocation2 + $0x20] sm:$0xff] %vm296, 0.0
        %302 = vst.msk [vmem:[#allocation2 + $0x28] sm:$0xff] %vm296, 0.0
        %303 = vst.msk [vmem:[#allocation2 + $0x30] sm:$0xff] %vm296, 0.0
        %304 = vst.msk [vmem:[#allocation2 + $0x38] sm:$0xff] %vm296, 0.0
        %305 = vst.msk [vmem:[#allocation2 + $0x40] sm:$0xff] %vm296, 0.0
        %306 = vst.msk [vmem:[#allocation2 + $0x48] sm:$0xff] %vm296, 0.0
        %307 = vst.msk [vmem:[#allocation2 + $0x50] sm:$0xff] %vm296, 0.0
      $region40: #{tpu_custom_call.1} parent=35 // pred_fallthru
        _
      %v308 = vld [vmem:[%s264] sm:$0xff]
      %v309 = vld [vmem:[%s273] sm:$0xff]
      %v310 = vld [vmem:[%s273 + $0x8] sm:$0xff]
      %v311 = vld [vmem:[%s273 + $0x10] sm:$0xf]
      %v312 = vld [vmem:[%s287] sm:$0xff]
      %v313 = vld [vmem:[%s287 + $0x8] sm:$0xff]
      %v314 = vld [vmem:[%s287 + $0x10] sm:$0xf]
      %v315 = vmul.f32 %v308, %v308
      %vm316 = vcmask 261120
      %v317 = vsel %vm316, %v315, 0.0
      %318 = vadd.xlane.f32.xlu0 %v317
      %v319 = vpop.xlane.xlu0 %318
      %v320 = vrsqrt.pop %v319
      %v321 = vmul.f32 %v319, 0.5
      %v322 = vmul.f32 %v321, %v320
      %v323 = vmul.f32 %v322, %v320
      %v324 = vsub.f32 1.5, %v323
      %v325 = vmul.f32 %v320, %v324
      %v326 = vmul.f32 %v308, %v325
      %v327 = vmul.f32 %v309, %v309
      %v328 = vmul.f32 %v310, %v310
      %v329 = vmul.f32 %v311, %v311
      %v330 = vsel %vm316, %v327, 0.0
      %331 = vadd.xlane.f32.xlu0 %v330
      %v332 = vpop.xlane.xlu0 %331
      %v333 = vsel %vm316, %v328, 0.0
      %334 = vadd.xlane.f32.xlu0 %v333
      %v335 = vpop.xlane.xlu0 %334
      %vm336 = vcmask 257024
      %v337 = vsel %vm336, %v329, 0.0
      %338 = vadd.xlane.f32.xlu0 %v337
      %v339 = vpop.xlane.xlu0 %338
      %v340 = vrsqrt.pop %v332
      %v341 = vrsqrt.pop %v335
      %v342 = vrsqrt.pop %v339
      %v343 = vmul.f32 %v332, 0.5
      %v344 = vmul.f32 %v335, 0.5
      %v345 = vmul.f32 %v339, 0.5
      %v346 = vmul.f32 %v343, %v340
      %v347 = vmul.f32 %v344, %v341
      %v348 = vmul.f32 %v345, %v342
      %v349 = vmul.f32 %v346, %v340
      %v350 = vmul.f32 %v347, %v341
      %v351 = vmul.f32 %v348, %v342
      %v352 = vsub.f32 1.5, %v349
      %v353 = vsub.f32 1.5, %v350
      %v354 = vsub.f32 1.5, %v351
      %v355 = vmul.f32 %v340, %v352
      %v356 = vmul.f32 %v341, %v353
      %v357 = vmul.f32 %v342, %v354
      %v358 = vmul.f32 %v309, %v355
      %v359 = vmul.f32 %v310, %v356
      %v360 = vmul.f32 %v311, %v357
      %v362 = vsel %vm316, %v326, 0
      %v365 = vsel %vm316, %v358, 0
      %v368 = vsel %vm316, %v359, 0
      %v371 = vsel %vm316, %v360, 0
      %373 = vmatprep.subr.mxu0 0.0
      %v374 = vand.u32 %v365, 4294901760
      %375 = vmatpush1.xpose.msra.mxu0 %v374
      %376 = vmatprep.subr.mxu0 0.0
      %v377 = vand.u32 %v368, 4294901760
      %378 = vmatpush1.xpose.msra.mxu0 %v377
      %379 = vmatprep.subr.mxu0 0.0
      %v380 = vand.u32 %v371, 4294901760
      %381 = vmatpush1.xpose.msra.mxu0 %v380
      %382 = vmatprep.subr.mxu0 0.0
      %383 = vmatpush1.xpose.msra.mxu0 0.0
      %384 = vmatprep.subr.mxu0 0.0
      %385 = vmatpush1.xpose.msra.mxu0 0.0
      %386 = vmatprep.subr.mxu0 0.0
      %387 = vmatpush1.xpose.msra.mxu0 0.0
      %388 = vmatprep.subr.mxu0 0.0
      %389 = vmatpush1.xpose.msra.mxu0 0.0
      %390 = vmatprep.subr.mxu0 0.0
      %391 = vmatpush1.xpose.msra.mxu0 0.0
      %392 = vmatprep.subr.mxu0 0.0
      %393 = vmatpush1.xpose.msra.mxu0 0.0
      %394 = vmatprep.subr.mxu0 0.0
      %395 = vmatpush1.xpose.msra.mxu0 0.0
      %396 = vmatprep.subr.mxu0 0.0
      %397 = vmatpush1.xpose.msra.mxu0 0.0
      %398 = vmatprep.subr.mxu0 0.0
      %399 = vmatpush1.xpose.msra.mxu0 0.0
      %400 = vmatprep.subr.mxu0 0.0
      %401 = vmatpush1.xpose.msra.mxu0 0.0
      %402 = vmatprep.subr.mxu0 0.0
      %403 = vmatpush1.xpose.msra.mxu0 0.0
      %404 = vmatprep.subr.mxu0 0.0
      %405 = vmatpush1.xpose.msra.mxu0 0.0
      %406 = vmatprep.subr.mxu0 0.0
      %407 = vmatpush1.xpose.msra.mxu0 0.0
      %408 = vmatprep.subr.mxu0 0.0
      %409 = vmatpush1.xpose.msra.mxu0 0.0
      %410 = vmatprep.subr.mxu0 0.0
      %411 = vmatpush1.xpose.msra.mxu0 0.0
      %412 = vmatprep.subr.mxu0 0.0
      %413 = vmatpush1.xpose.msra.mxu0 0.0
      %414 = vmatprep.subr.mxu0 0.0
      %415 = vmatpush1.xpose.msra.mxu0 0.0
      %416 = vmatprep.subr.mxu0 0.0
      %417 = vmatpush1.xpose.msra.mxu0 0.0
      %418 = vmatprep.subr.mxu0 0.0
      %419 = vmatpush1.xpose.msra.mxu0 0.0
      %420 = vmatprep.subr.mxu0 0.0
      %421 = vmatpush1.xpose.msra.mxu0 0.0
      %422 = vmatprep.subr.mxu0 0.0
      %423 = vmatpush1.xpose.msra.mxu0 0.0
      %424 = vmatprep.subr.mxu0 0.0
      %425 = vmatpush1.xpose.msra.mxu0 0.0
      %426 = vmatprep.subr.mxu0 0.0
      %427 = vmatpush1.xpose.msra.mxu0 0.0
      %428 = vmatprep.subr.mxu0 0.0
      %429 = vmatpush1.xpose.msra.mxu0 0.0
      %430 = vmatprep.subr.mxu0 0.0
      %431 = vmatpush1.xpose.msra.mxu0 0.0
      %432 = vmatprep.subr.mxu0 0.0
      %433 = vmatpush1.xpose.msra.mxu0 0.0
      %434 = vmatprep.subr.mxu0 0.0
      %435 = vmatpush1.xpose.msra.mxu0 0.0
      %436 = vmatprep.subr.mxu0 0.0
      %437 = vmatpush1.xpose.msra.mxu0 0.0
      %438 = vmatprep.subr.mxu0 0.0
      %439 = vmatpush1.xpose.msra.mxu0 0.0
      %440 = vmatprep.mubr.f32.mxu0 0.0
      %v441 = vand.u32 %v362, 4294901760
      %v442 = vsub.f32 %v362, %v441
      %v443 = vand.u32 %v442, 4294901760
      %v444 = vsub.f32 %v442, %v443
      %v445 = vand.u32 %v444, 4294901760
      %446 = vmatmul.mubr.f32.gmra.mrb[0].mxu0 %v445
      %v447 = vpop.f32.mrb[0].mxu0
      %v448 = vadd.f32 0.0, %v447
      %v449 = vpop.f32.mrb[0].mxu0
      %450 = vdwg.mxu0
      %451 = vmatprep.subr.mxu0 0.0
      %v452 = vand.u32 %v365, 4294901760
      %v453 = vsub.f32 %v365, %v452
      %v454 = vand.u32 %v453, 4294901760
      %v455 = vsub.f32 %v453, %v454
      %v456 = vand.u32 %v455, 4294901760
      %457 = vmatpush1.xpose.msra.mxu0 %v456
      %458 = vmatprep.subr.mxu0 0.0
      %v459 = vand.u32 %v368, 4294901760
      %v460 = vsub.f32 %v368, %v459
      %v461 = vand.u32 %v460, 4294901760
      %v462 = vsub.f32 %v460, %v461
      %v463 = vand.u32 %v462, 4294901760
      %464 = vmatpush1.xpose.msra.mxu0 %v463
      %465 = vmatprep.subr.mxu0 0.0
      %v466 = vand.u32 %v371, 4294901760
      %v467 = vsub.f32 %v371, %v466
      %v468 = vand.u32 %v467, 4294901760
      %v469 = vsub.f32 %v467, %v468
      %v470 = vand.u32 %v469, 4294901760
      %471 = vmatpush1.xpose.msra.mxu0 %v470
      %472 = vmatprep.subr.mxu0 0.0
      %473 = vmatpush1.xpose.msra.mxu0 0.0
      %474 = vmatprep.subr.mxu0 0.0
      %475 = vmatpush1.xpose.msra.mxu0 0.0
      %476 = vmatprep.subr.mxu0 0.0
      %477 = vmatpush1.xpose.msra.mxu0 0.0
      %478 = vmatprep.subr.mxu0 0.0
      %479 = vmatpush1.xpose.msra.mxu0 0.0
      %480 = vmatprep.subr.mxu0 0.0
      %481 = vmatpush1.xpose.msra.mxu0 0.0
      %482 = vmatprep.subr.mxu0 0.0
      %483 = vmatpush1.xpose.msra.mxu0 0.0
      %484 = vmatprep.subr.mxu0 0.0
      %485 = vmatpush1.xpose.msra.mxu0 0.0
      %486 = vmatprep.subr.mxu0 0.0
      %487 = vmatpush1.xpose.msra.mxu0 0.0
      %488 = vmatprep.subr.mxu0 0.0
      %489 = vmatpush1.xpose.msra.mxu0 0.0
      %490 = vmatprep.subr.mxu0 0.0
      %491 = vmatpush1.xpose.msra.mxu0 0.0
      %492 = vmatprep.subr.mxu0 0.0
      %493 = vmatpush1.xpose.msra.mxu0 0.0
      %494 = vmatprep.subr.mxu0 0.0
      %495 = vmatpush1.xpose.msra.mxu0 0.0
      %496 = vmatprep.subr.mxu0 0.0
      %497 = vmatpush1.xpose.msra.mxu0 0.0
      %498 = vmatprep.subr.mxu0 0.0
      %499 = vmatpush1.xpose.msra.mxu0 0.0
      %500 = vmatprep.subr.mxu0 0.0
      %501 = vmatpush1.xpose.msra.mxu0 0.0
      %502 = vmatprep.subr.mxu0 0.0
      %503 = vmatpush1.xpose.msra.mxu0 0.0
      %504 = vmatprep.subr.mxu0 0.0
      %505 = vmatpush1.xpose.msra.mxu0 0.0
      %506 = vmatprep.subr.mxu0 0.0
      %507 = vmatpush1.xpose.msra.mxu0 0.0
      %508 = vmatprep.subr.mxu0 0.0
      %509 = vmatpush1.xpose.msra.mxu0 0.0
      %510 = vmatprep.subr.mxu0 0.0
      %511 = vmatpush1.xpose.msra.mxu0 0.0
      %512 = vmatprep.subr.mxu0 0.0
      %513 = vmatpush1.xpose.msra.mxu0 0.0
      %514 = vmatprep.subr.mxu0 0.0
      %515 = vmatpush1.xpose.msra.mxu0 0.0
      %516 = vmatprep.subr.mxu0 0.0
      %517 = vmatpush1.xpose.msra.mxu0 0.0
      %518 = vmatprep.subr.mxu0 0.0
      %519 = vmatpush1.xpose.msra.mxu0 0.0
      %520 = vmatprep.subr.mxu0 0.0
      %521 = vmatpush1.xpose.msra.mxu0 0.0
      %522 = vmatprep.subr.mxu0 0.0
      %523 = vmatpush1.xpose.msra.mxu0 0.0
      %524 = vmatprep.subr.mxu0 0.0
      %525 = vmatpush1.xpose.msra.mxu0 0.0
      %526 = vmatprep.subr.mxu0 0.0
      %527 = vmatpush1.xpose.msra.mxu0 0.0
      %528 = vmatprep.subr.mxu0 0.0
      %529 = vmatpush1.xpose.msra.mxu0 0.0
      %530 = vmatprep.mubr.f32.mxu0 0.0
      %v531 = vand.u32 %v362, 4294901760
      %532 = vmatmul.mubr.f32.gmra.mrb[0].mxu0 %v531
      %v533 = vpop.f32.mrb[0].mxu0
      %v534 = vadd.f32 %v448, %v533
      %v535 = vpop.f32.mrb[0].mxu0
      %536 = vdwg.mxu0
      %537 = vmatprep.subr.mxu0 0.0
      %v538 = vand.u32 %v365, 4294901760
      %v539 = vsub.f32 %v365, %v538
      %540 = vmatpush1.xpose.msra.mxu0 %v539
      %541 = vmatprep.subr.mxu0 0.0
      %v542 = vand.u32 %v368, 4294901760
      %v543 = vsub.f32 %v368, %v542
      %544 = vmatpush1.xpose.msra.mxu0 %v543
      %545 = vmatprep.subr.mxu0 0.0
      %v546 = vand.u32 %v371, 4294901760
      %v547 = vsub.f32 %v371, %v546
      %548 = vmatpush1.xpose.msra.mxu0 %v547
      %549 = vmatprep.subr.mxu0 0.0
      %550 = vmatpush1.xpose.msra.mxu0 0.0
      %551 = vmatprep.subr.mxu0 0.0
      %552 = vmatpush1.xpose.msra.mxu0 0.0
      %553 = vmatprep.subr.mxu0 0.0
      %554 = vmatpush1.xpose.msra.mxu0 0.0
      %555 = vmatprep.subr.mxu0 0.0
      %556 = vmatpush1.xpose.msra.mxu0 0.0
      %557 = vmatprep.subr.mxu0 0.0
      %558 = vmatpush1.xpose.msra.mxu0 0.0
      %559 = vmatprep.subr.mxu0 0.0
      %560 = vmatpush1.xpose.msra.mxu0 0.0
      %561 = vmatprep.subr.mxu0 0.0
      %562 = vmatpush1.xpose.msra.mxu0 0.0
      %563 = vmatprep.subr.mxu0 0.0
      %564 = vmatpush1.xpose.msra.mxu0 0.0
      %565 = vmatprep.subr.mxu0 0.0
      %566 = vmatpush1.xpose.msra.mxu0 0.0
      %567 = vmatprep.subr.mxu0 0.0
      %568 = vmatpush1.xpose.msra.mxu0 0.0
      %569 = vmatprep.subr.mxu0 0.0
      %570 = vmatpush1.xpose.msra.mxu0 0.0
      %571 = vmatprep.subr.mxu0 0.0
      %572 = vmatpush1.xpose.msra.mxu0 0.0
      %573 = vmatprep.subr.mxu0 0.0
      %574 = vmatpush1.xpose.msra.mxu0 0.0
      %575 = vmatprep.subr.mxu0 0.0
      %576 = vmatpush1.xpose.msra.mxu0 0.0
      %577 = vmatprep.subr.mxu0 0.0
      %578 = vmatpush1.xpose.msra.mxu0 0.0
      %579 = vmatprep.subr.mxu0 0.0
      %580 = vmatpush1.xpose.msra.mxu0 0.0
      %581 = vmatprep.subr.mxu0 0.0
      %582 = vmatpush1.xpose.msra.mxu0 0.0
      %583 = vmatprep.subr.mxu0 0.0
      %584 = vmatpush1.xpose.msra.mxu0 0.0
      %585 = vmatprep.subr.mxu0 0.0
      %586 = vmatpush1.xpose.msra.mxu0 0.0
      %587 = vmatprep.subr.mxu0 0.0
      %588 = vmatpush1.xpose.msra.mxu0 0.0
      %589 = vmatprep.subr.mxu0 0.0
      %590 = vmatpush1.xpose.msra.mxu0 0.0
      %591 = vmatprep.subr.mxu0 0.0
      %592 = vmatpush1.xpose.msra.mxu0 0.0
      %593 = vmatprep.subr.mxu0 0.0
      %594 = vmatpush1.xpose.msra.mxu0 0.0
      %595 = vmatprep.subr.mxu0 0.0
      %596 = vmatpush1.xpose.msra.mxu0 0.0
      %597 = vmatprep.subr.mxu0 0.0
      %598 = vmatpush1.xpose.msra.mxu0 0.0
      %599 = vmatprep.subr.mxu0 0.0
      %600 = vmatpush1.xpose.msra.mxu0 0.0
      %601 = vmatprep.subr.mxu0 0.0
      %602 = vmatpush1.xpose.msra.mxu0 0.0
      %603 = vmatprep.subr.mxu0 0.0
      %604 = vmatpush1.xpose.msra.mxu0 0.0
      %605 = vmatprep.subr.mxu0 0.0
      %606 = vmatpush1.xpose.msra.mxu0 0.0
      %607 = vmatprep.mubr.f32.mxu0 0.0
      %v608 = vand.u32 %v362, 4294901760
      %v609 = vsub.f32 %v362, %v608
      %610 = vmatmul.mubr.f32.gmra.mrb[0].mxu0 %v609
      %v611 = vpop.f32.mrb[0].mxu0
      %v612 = vadd.f32 %v534, %v611
      %v613 = vpop.f32.mrb[0].mxu0
      %614 = vdwg.mxu0
      %615 = vmatprep.subr.mxu0 0.0
      %v616 = vand.u32 %v365, 4294901760
      %617 = vmatpush1.xpose.msra.mxu0 %v616
      %618 = vmatprep.subr.mxu0 0.0
      %v619 = vand.u32 %v368, 4294901760
      %620 = vmatpush1.xpose.msra.mxu0 %v619
      %621 = vmatprep.subr.mxu0 0.0
      %v622 = vand.u32 %v371, 4294901760
      %623 = vmatpush1.xpose.msra.mxu0 %v622
      %624 = vmatprep.subr.mxu0 0.0
      %625 = vmatpush1.xpose.msra.mxu0 0.0
      %626 = vmatprep.subr.mxu0 0.0
      %627 = vmatpush1.xpose.msra.mxu0 0.0
      %628 = vmatprep.subr.mxu0 0.0
      %629 = vmatpush1.xpose.msra.mxu0 0.0
      %630 = vmatprep.subr.mxu0 0.0
      %631 = vmatpush1.xpose.msra.mxu0 0.0
      %632 = vmatprep.subr.mxu0 0.0
      %633 = vmatpush1.xpose.msra.mxu0 0.0
      %634 = vmatprep.subr.mxu0 0.0
      %635 = vmatpush1.xpose.msra.mxu0 0.0
      %636 = vmatprep.subr.mxu0 0.0
      %637 = vmatpush1.xpose.msra.mxu0 0.0
      %638 = vmatprep.subr.mxu0 0.0
      %639 = vmatpush1.xpose.msra.mxu0 0.0
      %640 = vmatprep.subr.mxu0 0.0
      %641 = vmatpush1.xpose.msra.mxu0 0.0
      %642 = vmatprep.subr.mxu0 0.0
      %643 = vmatpush1.xpose.msra.mxu0 0.0
      %644 = vmatprep.subr.mxu0 0.0
      %645 = vmatpush1.xpose.msra.mxu0 0.0
      %646 = vmatprep.subr.mxu0 0.0
      %647 = vmatpush1.xpose.msra.mxu0 0.0
      %648 = vmatprep.subr.mxu0 0.0
      %649 = vmatpush1.xpose.msra.mxu0 0.0
      %650 = vmatprep.subr.mxu0 0.0
      %651 = vmatpush1.xpose.msra.mxu0 0.0
      %652 = vmatprep.subr.mxu0 0.0
      %653 = vmatpush1.xpose.msra.mxu0 0.0
      %654 = vmatprep.subr.mxu0 0.0
      %655 = vmatpush1.xpose.msra.mxu0 0.0
      %656 = vmatprep.subr.mxu0 0.0
      %657 = vmatpush1.xpose.msra.mxu0 0.0
      %658 = vmatprep.subr.mxu0 0.0
      %659 = vmatpush1.xpose.msra.mxu0 0.0
      %660 = vmatprep.subr.mxu0 0.0
      %661 = vmatpush1.xpose.msra.mxu0 0.0
      %662 = vmatprep.subr.mxu0 0.0
      %663 = vmatpush1.xpose.msra.mxu0 0.0
      %664 = vmatprep.subr.mxu0 0.0
      %665 = vmatpush1.xpose.msra.mxu0 0.0
      %666 = vmatprep.subr.mxu0 0.0
      %667 = vmatpush1.xpose.msra.mxu0 0.0
      %668 = vmatprep.subr.mxu0 0.0
      %669 = vmatpush1.xpose.msra.mxu0 0.0
      %670 = vmatprep.subr.mxu0 0.0
      %671 = vmatpush1.xpose.msra.mxu0 0.0
      %672 = vmatprep.subr.mxu0 0.0
      %673 = vmatpush1.xpose.msra.mxu0 0.0
      %674 = vmatprep.subr.mxu0 0.0
      %675 = vmatpush1.xpose.msra.mxu0 0.0
      %676 = vmatprep.subr.mxu0 0.0
      %677 = vmatpush1.xpose.msra.mxu0 0.0
      %678 = vmatprep.subr.mxu0 0.0
      %679 = vmatpush1.xpose.msra.mxu0 0.0
      %680 = vmatprep.subr.mxu0 0.0
      %681 = vmatpush1.xpose.msra.mxu0 0.0
      %682 = vmatprep.mubr.f32.mxu0 0.0
      %v683 = vand.u32 %v362, 4294901760
      %v684 = vsub.f32 %v362, %v683
      %v685 = vand.u32 %v684, 4294901760
      %686 = vmatmul.mubr.f32.gmra.mrb[0].mxu0 %v685
      %v687 = vpop.f32.mrb[0].mxu0
      %v688 = vadd.f32 %v612, %v687
      %v689 = vpop.f32.mrb[0].mxu0
      %690 = vdwg.mxu0
      %691 = vmatprep.subr.mxu0 0.0
      %v692 = vand.u32 %v365, 4294901760
      %v693 = vsub.f32 %v365, %v692
      %v694 = vand.u32 %v693, 4294901760
      %695 = vmatpush1.xpose.msra.mxu0 %v694
      %696 = vmatprep.subr.mxu0 0.0
      %v697 = vand.u32 %v368, 4294901760
      %v698 = vsub.f32 %v368, %v697
      %v699 = vand.u32 %v698, 4294901760
      %700 = vmatpush1.xpose.msra.mxu0 %v699
      %701 = vmatprep.subr.mxu0 0.0
      %v702 = vand.u32 %v371, 4294901760
      %v703 = vsub.f32 %v371, %v702
      %v704 = vand.u32 %v703, 4294901760
      %705 = vmatpush1.xpose.msra.mxu0 %v704
      %706 = vmatprep.subr.mxu0 0.0
      %707 = vmatpush1.xpose.msra.mxu0 0.0
      %708 = vmatprep.subr.mxu0 0.0
      %709 = vmatpush1.xpose.msra.mxu0 0.0
      %710 = vmatprep.subr.mxu0 0.0
      %711 = vmatpush1.xpose.msra.mxu0 0.0
      %712 = vmatprep.subr.mxu0 0.0
      %713 = vmatpush1.xpose.msra.mxu0 0.0
      %714 = vmatprep.subr.mxu0 0.0
      %715 = vmatpush1.xpose.msra.mxu0 0.0
      %716 = vmatprep.subr.mxu0 0.0
      %717 = vmatpush1.xpose.msra.mxu0 0.0
      %718 = vmatprep.subr.mxu0 0.0
      %719 = vmatpush1.xpose.msra.mxu0 0.0
      %720 = vmatprep.subr.mxu0 0.0
      %721 = vmatpush1.xpose.msra.mxu0 0.0
      %722 = vmatprep.subr.mxu0 0.0
      %723 = vmatpush1.xpose.msra.mxu0 0.0
      %724 = vmatprep.subr.mxu0 0.0
      %725 = vmatpush1.xpose.msra.mxu0 0.0
      %726 = vmatprep.subr.mxu0 0.0
      %727 = vmatpush1.xpose.msra.mxu0 0.0
      %728 = vmatprep.subr.mxu0 0.0
      %729 = vmatpush1.xpose.msra.mxu0 0.0
      %730 = vmatprep.subr.mxu0 0.0
      %731 = vmatpush1.xpose.msra.mxu0 0.0
      %732 = vmatprep.subr.mxu0 0.0
      %733 = vmatpush1.xpose.msra.mxu0 0.0
      %734 = vmatprep.subr.mxu0 0.0
      %735 = vmatpush1.xpose.msra.mxu0 0.0
      %736 = vmatprep.subr.mxu0 0.0
      %737 = vmatpush1.xpose.msra.mxu0 0.0
      %738 = vmatprep.subr.mxu0 0.0
      %739 = vmatpush1.xpose.msra.mxu0 0.0
      %740 = vmatprep.subr.mxu0 0.0
      %741 = vmatpush1.xpose.msra.mxu0 0.0
      %742 = vmatprep.subr.mxu0 0.0
      %743 = vmatpush1.xpose.msra.mxu0 0.0
      %744 = vmatprep.subr.mxu0 0.0
      %745 = vmatpush1.xpose.msra.mxu0 0.0
      %746 = vmatprep.subr.mxu0 0.0
      %747 = vmatpush1.xpose.msra.mxu0 0.0
      %748 = vmatprep.subr.mxu0 0.0
      %749 = vmatpush1.xpose.msra.mxu0 0.0
      %750 = vmatprep.subr.mxu0 0.0
      %751 = vmatpush1.xpose.msra.mxu0 0.0
      %752 = vmatprep.subr.mxu0 0.0
      %753 = vmatpush1.xpose.msra.mxu0 0.0
      %754 = vmatprep.subr.mxu0 0.0
      %755 = vmatpush1.xpose.msra.mxu0 0.0
      %756 = vmatprep.subr.mxu0 0.0
      %757 = vmatpush1.xpose.msra.mxu0 0.0
      %758 = vmatprep.subr.mxu0 0.0
      %759 = vmatpush1.xpose.msra.mxu0 0.0
      %760 = vmatprep.subr.mxu0 0.0
      %761 = vmatpush1.xpose.msra.mxu0 0.0
      %762 = vmatprep.subr.mxu0 0.0
      %763 = vmatpush1.xpose.msra.mxu0 0.0
      %764 = vmatprep.mubr.f32.mxu0 0.0
      %v765 = vand.u32 %v362, 4294901760
      %766 = vmatmul.mubr.f32.gmra.mrb[0].mxu0 %v765
      %v767 = vpop.f32.mrb[0].mxu0
      %v768 = vadd.f32 %v688, %v767
      %v769 = vpop.f32.mrb[0].mxu0
      %770 = vdwg.mxu0
      %771 = vmatprep.subr.mxu0 0.0
      %v772 = vand.u32 %v365, 4294901760
      %773 = vmatpush1.xpose.msra.mxu0 %v772
      %774 = vmatprep.subr.mxu0 0.0
      %v775 = vand.u32 %v368, 4294901760
      %776 = vmatpush1.xpose.msra.mxu0 %v775
      %777 = vmatprep.subr.mxu0 0.0
      %v778 = vand.u32 %v371, 4294901760
      %779 = vmatpush1.xpose.msra.mxu0 %v778
      %780 = vmatprep.subr.mxu0 0.0
      %781 = vmatpush1.xpose.msra.mxu0 0.0
      %782 = vmatprep.subr.mxu0 0.0
      %783 = vmatpush1.xpose.msra.mxu0 0.0
      %784 = vmatprep.subr.mxu0 0.0
      %785 = vmatpush1.xpose.msra.mxu0 0.0
      %786 = vmatprep.subr.mxu0 0.0
      %787 = vmatpush1.xpose.msra.mxu0 0.0
      %788 = vmatprep.subr.mxu0 0.0
      %789 = vmatpush1.xpose.msra.mxu0 0.0
      %790 = vmatprep.subr.mxu0 0.0
      %791 = vmatpush1.xpose.msra.mxu0 0.0
      %792 = vmatprep.subr.mxu0 0.0
      %793 = vmatpush1.xpose.msra.mxu0 0.0
      %794 = vmatprep.subr.mxu0 0.0
      %795 = vmatpush1.xpose.msra.mxu0 0.0
      %796 = vmatprep.subr.mxu0 0.0
      %797 = vmatpush1.xpose.msra.mxu0 0.0
      %798 = vmatprep.subr.mxu0 0.0
      %799 = vmatpush1.xpose.msra.mxu0 0.0
      %800 = vmatprep.subr.mxu0 0.0
      %801 = vmatpush1.xpose.msra.mxu0 0.0
      %802 = vmatprep.subr.mxu0 0.0
      %803 = vmatpush1.xpose.msra.mxu0 0.0
      %804 = vmatprep.subr.mxu0 0.0
      %805 = vmatpush1.xpose.msra.mxu0 0.0
      %806 = vmatprep.subr.mxu0 0.0
      %807 = vmatpush1.xpose.msra.mxu0 0.0
      %808 = vmatprep.subr.mxu0 0.0
      %809 = vmatpush1.xpose.msra.mxu0 0.0
      %810 = vmatprep.subr.mxu0 0.0
      %811 = vmatpush1.xpose.msra.mxu0 0.0
      %812 = vmatprep.subr.mxu0 0.0
      %813 = vmatpush1.xpose.msra.mxu0 0.0
      %814 = vmatprep.subr.mxu0 0.0
      %815 = vmatpush1.xpose.msra.mxu0 0.0
      %816 = vmatprep.subr.mxu0 0.0
      %817 = vmatpush1.xpose.msra.mxu0 0.0
      %818 = vmatprep.subr.mxu0 0.0
      %819 = vmatpush1.xpose.msra.mxu0 0.0
      %820 = vmatprep.subr.mxu0 0.0
      %821 = vmatpush1.xpose.msra.mxu0 0.0
      %822 = vmatprep.subr.mxu0 0.0
      %823 = vmatpush1.xpose.msra.mxu0 0.0
      %824 = vmatprep.subr.mxu0 0.0
      %825 = vmatpush1.xpose.msra.mxu0 0.0
      %826 = vmatprep.subr.mxu0 0.0
      %827 = vmatpush1.xpose.msra.mxu0 0.0
      %828 = vmatprep.subr.mxu0 0.0
      %829 = vmatpush1.xpose.msra.mxu0 0.0
      %830 = vmatprep.subr.mxu0 0.0
      %831 = vmatpush1.xpose.msra.mxu0 0.0
      %832 = vmatprep.subr.mxu0 0.0
      %833 = vmatpush1.xpose.msra.mxu0 0.0
      %834 = vmatprep.subr.mxu0 0.0
      %835 = vmatpush1.xpose.msra.mxu0 0.0
      %836 = vmatprep.subr.mxu0 0.0
      %837 = vmatpush1.xpose.msra.mxu0 0.0
      %838 = vmatprep.mubr.f32.mxu0 0.0
      %v839 = vand.u32 %v362, 4294901760
      %840 = vmatmul.mubr.f32.gmra.mrb[0].mxu0 %v839
      %v841 = vpop.f32.mrb[0].mxu0
      %v842 = vadd.f32 %v768, %v841
      %v843 = vpop.f32.mrb[0].mxu0
      %844 = vdwg.mxu0
      %v845 = vsub.f32 %v842, 1.0
      %v846 = vand.u32 2147483647, %v845
      %vm847 = vcmp.le.f32.partialorder %v846, 0.000117741
      %v848 = vsel %vm847, 1.0, 0.0
      %v849 = vsub.f32 %v842, 0.9
      %v850 = vmul.f32 %v849, %v849
      %v851 = vmul.f32 %v850, -50.0
      %v852 = vmul.f32 %v851, 1.442695
      %v853 = vpow.pop %v852
      %v854 = vsub.f32 %v842, 0.7
      %v855 = vmul.f32 %v854, %v854
      %v856 = vmul.f32 %v855, -50.0
      %v857 = vmul.f32 %v856, 1.442695
      %v858 = vpow.pop %v857
      %v859 = vsub.f32 %v842, 0.5
      %v860 = vmul.f32 %v859, %v859
      %v861 = vmul.f32 %v860, -50.0
      %v862 = vmul.f32 %v861, 1.442695
      %v863 = vpow.pop %v862
      %v864 = vsub.f32 %v842, 0.3
      %v865 = vmul.f32 %v864, %v864
      %v866 = vmul.f32 %v865, -50.0
      %v867 = vmul.f32 %v866, 1.442695
      %v868 = vpow.pop %v867
      %v869 = vsub.f32 %v842, 0.1
      %v870 = vmul.f32 %v869, %v869
      %v871 = vmul.f32 %v870, -50.0
      %v872 = vmul.f32 %v871, 1.442695
      %v873 = vpow.pop %v872
      %v874 = vsub.f32 %v842, -0.1
      %v875 = vmul.f32 %v874, %v874
      %v876 = vmul.f32 %v875, -50.0
      %v877 = vmul.f32 %v876, 1.442695
      %v878 = vpow.pop %v877
      %v879 = vsub.f32 %v842, -0.3
      %v880 = vmul.f32 %v879, %v879
      %v881 = vmul.f32 %v880, -50.0
      %v882 = vmul.f32 %v881, 1.442695
      %v883 = vpow.pop %v882
      %v884 = vsub.f32 %v842, -0.5
      %v885 = vmul.f32 %v884, %v884
      %v886 = vmul.f32 %v885, -50.0
      %v887 = vmul.f32 %v886, 1.442695
      %v888 = vpow.pop %v887
      %v889 = vsub.f32 %v842, -0.7
      %v890 = vmul.f32 %v889, %v889
      %v891 = vmul.f32 %v890, -50.0
      %v892 = vmul.f32 %v891, 1.442695
      %v893 = vpow.pop %v892
      %v894 = vsub.f32 %v842, -0.9
      %v895 = vmul.f32 %v894, %v894
      %v896 = vmul.f32 %v895, -50.0
      %v897 = vmul.f32 %v896, 1.442695
      %v898 = vpow.pop %v897
      %vm899 = vcmask 162816
      %v901 = vsel %vm899, %v848, 0
      %v904 = vsel %vm899, %v853, 0
      %v907 = vsel %vm899, %v858, 0
      %v910 = vsel %vm899, %v863, 0
      %v913 = vsel %vm899, %v868, 0
      %v916 = vsel %vm899, %v873, 0
      %v919 = vsel %vm899, %v878, 0
      %v922 = vsel %vm899, %v883, 0
      %v925 = vsel %vm899, %v888, 0
      %v928 = vsel %vm899, %v893, 0
      %v931 = vsel %vm899, %v898, 0
      %vm933 = vcmask 1043456
      %v935 = vsel %vm933, %v314, 0
      %937 = vmatprep.subr.mxu0 0.0
      %v938 = vand.u32 %v312, 4294901760
      %939 = vmatpush1.msra.mxu0 %v938
      %940 = vmatprep.subr.mxu0 0.0
      %v941 = vand.u32 %v313, 4294901760
      %942 = vmatpush1.msra.mxu0 %v941
      %943 = vmatprep.subr.mxu0 0.0
      %v944 = vand.u32 %v935, 4294901760
      %945 = vmatpush1.msra.mxu0 %v944
      %946 = vmatprep.subr.mxu0 0.0
      %947 = vmatpush1.msra.mxu0 0.0
      %948 = vmatprep.subr.mxu0 0.0
      %949 = vmatpush1.msra.mxu0 0.0
      %950 = vmatprep.subr.mxu0 0.0
      %951 = vmatpush1.msra.mxu0 0.0
      %952 = vmatprep.subr.mxu0 0.0
      %953 = vmatpush1.msra.mxu0 0.0
      %954 = vmatprep.subr.mxu0 0.0
      %955 = vmatpush1.msra.mxu0 0.0
      %956 = vmatprep.subr.mxu0 0.0
      %957 = vmatpush1.msra.mxu0 0.0
      %958 = vmatprep.subr.mxu0 0.0
      %959 = vmatpush1.msra.mxu0 0.0
      %960 = vmatprep.subr.mxu0 0.0
      %961 = vmatpush1.msra.mxu0 0.0
      %962 = vmatprep.subr.mxu0 0.0
      %963 = vmatpush1.msra.mxu0 0.0
      %964 = vmatprep.subr.mxu0 0.0
      %965 = vmatpush1.msra.mxu0 0.0
      %966 = vmatprep.subr.mxu0 0.0
      %967 = vmatpush1.msra.mxu0 0.0
      %968 = vmatprep.subr.mxu0 0.0
      %969 = vmatpush1.msra.mxu0 0.0
      %970 = vmatprep.subr.mxu0 0.0
      %971 = vmatpush1.msra.mxu0 0.0
      %972 = vmatprep.subr.mxu0 0.0
      %973 = vmatpush1.msra.mxu0 0.0
      %974 = vmatprep.subr.mxu0 0.0
      %975 = vmatpush1.msra.mxu0 0.0
      %976 = vmatprep.subr.mxu0 0.0
      %977 = vmatpush1.msra.mxu0 0.0
      %978 = vmatprep.subr.mxu0 0.0
      %979 = vmatpush1.msra.mxu0 0.0
      %980 = vmatprep.subr.mxu0 0.0
      %981 = vmatpush1.msra.mxu0 0.0
      %982 = vmatprep.subr.mxu0 0.0
      %983 = vmatpush1.msra.mxu0 0.0
      %984 = vmatprep.subr.mxu0 0.0
      %985 = vmatpush1.msra.mxu0 0.0
      %986 = vmatprep.subr.mxu0 0.0
      %987 = vmatpush1.msra.mxu0 0.0
      %988 = vmatprep.subr.mxu0 0.0
      %989 = vmatpush1.msra.mxu0 0.0
      %990 = vmatprep.subr.mxu0 0.0
      %991 = vmatpush1.msra.mxu0 0.0
      %992 = vmatprep.subr.mxu0 0.0
      %993 = vmatpush1.msra.mxu0 0.0
      %994 = vmatprep.subr.mxu0 0.0
      %995 = vmatpush1.msra.mxu0 0.0
      %996 = vmatprep.subr.mxu0 0.0
      %997 = vmatpush1.msra.mxu0 0.0
      %998 = vmatprep.subr.mxu0 0.0
      %999 = vmatpush1.msra.mxu0 0.0
      %1000 = vmatprep.subr.mxu0 0.0
      %1001 = vmatpush1.msra.mxu0 0.0
      %1002 = vmatprep.subr.mxu0 0.0
      %1003 = vmatpush1.msra.mxu0 0.0
      %1004 = vmatprep.mubr.f32.mxu0 0.0
      %v1005 = vand.u32 %v901, 4294901760
      %v1006 = vsub.f32 %v901, %v1005
      %v1007 = vand.u32 %v1006, 4294901760
      %v1008 = vsub.f32 %v1006, %v1007
      %v1009 = vand.u32 %v1008, 4294901760
      %1010 = vmatmul.mubr.f32.gmra.mrb[0].mxu0 %v1009
      %v1011 = vpop.f32.mrb[0].mxu0
      %v1012 = vadd.f32 0.0, %v1011
      %v1013 = vpop.f32.mrb[0].mxu0
      %1014 = vmatprep.mubr.f32.mxu0 0.0
      %v1015 = vand.u32 %v904, 4294901760
      %v1016 = vsub.f32 %v904, %v1015
      %v1017 = vand.u32 %v1016, 4294901760
      %v1018 = vsub.f32 %v1016, %v1017
      %v1019 = vand.u32 %v1018, 4294901760
      %1020 = vmatmul.mubr.f32.gmra.mrb[0].mxu0 %v1019
      %v1021 = vpop.f32.mrb[0].mxu0
      %v1022 = vadd.f32 0.0, %v1021
      %v1023 = vpop.f32.mrb[0].mxu0
      %1024 = vmatprep.mubr.f32.mxu0 0.0
      %v1025 = vand.u32 %v907, 4294901760
      %v1026 = vsub.f32 %v907, %v1025
      %v1027 = vand.u32 %v1026, 4294901760
      %v1028 = vsub.f32 %v1026, %v1027
      %v1029 = vand.u32 %v1028, 4294901760
      %1030 = vmatmul.mubr.f32.gmra.mrb[0].mxu0 %v1029
      %v1031 = vpop.f32.mrb[0].mxu0
      %v1032 = vadd.f32 0.0, %v1031
      %v1033 = vpop.f32.mrb[0].mxu0
      %1034 = vmatprep.mubr.f32.mxu0 0.0
      %v1035 = vand.u32 %v910, 4294901760
      %v1036 = vsub.f32 %v910, %v1035
      %v1037 = vand.u32 %v1036, 4294901760
      %v1038 = vsub.f32 %v1036, %v1037
      %v1039 = vand.u32 %v1038, 4294901760
      %1040 = vmatmul.mubr.f32.gmra.mrb[0].mxu0 %v1039
      %v1041 = vpop.f32.mrb[0].mxu0
      %v1042 = vadd.f32 0.0, %v1041
      %v1043 = vpop.f32.mrb[0].mxu0
      %1044 = vmatprep.mubr.f32.mxu0 0.0
      %v1045 = vand.u32 %v913, 4294901760
      %v1046 = vsub.f32 %v913, %v1045
      %v1047 = vand.u32 %v1046, 4294901760
      %v1048 = vsub.f32 %v1046, %v1047
      %v1049 = vand.u32 %v1048, 4294901760
      %1050 = vmatmul.mubr.f32.gmra.mrb[0].mxu0 %v1049
      %v1051 = vpop.f32.mrb[0].mxu0
      %v1052 = vadd.f32 0.0, %v1051
      %v1053 = vpop.f32.mrb[0].mxu0
      %1054 = vmatprep.mubr.f32.mxu0 0.0
      %v1055 = vand.u32 %v916, 4294901760
      %v1056 = vsub.f32 %v916, %v1055
      %v1057 = vand.u32 %v1056, 4294901760
      %v1058 = vsub.f32 %v1056, %v1057
      %v1059 = vand.u32 %v1058, 4294901760
      %1060 = vmatmul.mubr.f32.gmra.mrb[0].mxu0 %v1059
      %v1061 = vpop.f32.mrb[0].mxu0
      %v1062 = vadd.f32 0.0, %v1061
      %v1063 = vpop.f32.mrb[0].mxu0
      %1064 = vmatprep.mubr.f32.mxu0 0.0
      %v1065 = vand.u32 %v919, 4294901760
      %v1066 = vsub.f32 %v919, %v1065
      %v1067 = vand.u32 %v1066, 4294901760
      %v1068 = vsub.f32 %v1066, %v1067
      %v1069 = vand.u32 %v1068, 4294901760
      %1070 = vmatmul.mubr.f32.gmra.mrb[0].mxu0 %v1069
      %v1071 = vpop.f32.mrb[0].mxu0
      %v1072 = vadd.f32 0.0, %v1071
      %v1073 = vpop.f32.mrb[0].mxu0
      %1074 = vmatprep.mubr.f32.mxu0 0.0
      %v1075 = vand.u32 %v922, 4294901760
      %v1076 = vsub.f32 %v922, %v1075
      %v1077 = vand.u32 %v1076, 4294901760
      %v1078 = vsub.f32 %v1076, %v1077
      %v1079 = vand.u32 %v1078, 4294901760
      %1080 = vmatmul.mubr.f32.gmra.mrb[0].mxu0 %v1079
      %v1081 = vpop.f32.mrb[0].mxu0
      %v1082 = vadd.f32 0.0, %v1081
      %v1083 = vpop.f32.mrb[0].mxu0
      %1084 = vmatprep.mubr.f32.mxu0 0.0
      %v1085 = vand.u32 %v925, 4294901760
      %v1086 = vsub.f32 %v925, %v1085
      %v1087 = vand.u32 %v1086, 4294901760
      %v1088 = vsub.f32 %v1086, %v1087
      %v1089 = vand.u32 %v1088, 4294901760
      %1090 = vmatmul.mubr.f32.gmra.mrb[0].mxu0 %v1089
      %v1091 = vpop.f32.mrb[0].mxu0
      %v1092 = vadd.f32 0.0, %v1091
      %v1093 = vpop.f32.mrb[0].mxu0
      %1094 = vmatprep.mubr.f32.mxu0 0.0
      %v1095 = vand.u32 %v928, 4294901760
      %v1096 = vsub.f32 %v928, %v1095
      %v1097 = vand.u32 %v1096, 4294901760
      %v1098 = vsub.f32 %v1096, %v1097
      %v1099 = vand.u32 %v1098, 4294901760
      %1100 = vmatmul.mubr.f32.gmra.mrb[0].mxu0 %v1099
      %v1101 = vpop.f32.mrb[0].mxu0
      %v1102 = vadd.f32 0.0, %v1101
      %v1103 = vpop.f32.mrb[0].mxu0
      %1104 = vmatprep.mubr.f32.mxu0 0.0
      %v1105 = vand.u32 %v931, 4294901760
      %v1106 = vsub.f32 %v931, %v1105
      %v1107 = vand.u32 %v1106, 4294901760
      %v1108 = vsub.f32 %v1106, %v1107
      %v1109 = vand.u32 %v1108, 4294901760
      %1110 = vmatmul.mubr.f32.gmra.mrb[0].mxu0 %v1109
      %v1111 = vpop.f32.mrb[0].mxu0
      %v1112 = vadd.f32 0.0, %v1111
      %v1113 = vpop.f32.mrb[0].mxu0
      %1114 = vdwg.mxu0
      %1115 = vmatprep.subr.mxu0 0.0
      %v1116 = vand.u32 %v312, 4294901760
      %v1117 = vsub.f32 %v312, %v1116
      %v1118 = vand.u32 %v1117, 4294901760
      %v1119 = vsub.f32 %v1117, %v1118
      %v1120 = vand.u32 %v1119, 4294901760
      %1121 = vmatpush1.msra.mxu0 %v1120
      %1122 = vmatprep.subr.mxu0 0.0
      %v1123 = vand.u32 %v313, 4294901760
      %v1124 = vsub.f32 %v313, %v1123
      %v1125 = vand.u32 %v1124, 4294901760
      %v1126 = vsub.f32 %v1124, %v1125
      %v1127 = vand.u32 %v1126, 4294901760
      %1128 = vmatpush1.msra.mxu0 %v1127
      %1129 = vmatprep.subr.mxu0 0.0
      %v1130 = vand.u32 %v935, 4294901760
      %v1131 = vsub.f32 %v935, %v1130
      %v1132 = vand.u32 %v1131, 4294901760
      %v1133 = vsub.f32 %v1131, %v1132
      %v1134 = vand.u32 %v1133, 4294901760
      %1135 = vmatpush1.msra.mxu0 %v1134
      %1136 = vmatprep.subr.mxu0 0.0
      %1137 = vmatpush1.msra.mxu0 0.0
      %1138 = vmatprep.subr.mxu0 0.0
      %1139 = vmatpush1.msra.mxu0 0.0
      %1140 = vmatprep.subr.mxu0 0.0
      %1141 = vmatpush1.msra.mxu0 0.0
      %1142 = vmatprep.subr.mxu0 0.0
      %1143 = vmatpush1.msra.mxu0 0.0
      %1144 = vmatprep.subr.mxu0 0.0
      %1145 = vmatpush1.msra.mxu0 0.0
      %1146 = vmatprep.subr.mxu0 0.0
      %1147 = vmatpush1.msra.mxu0 0.0
      %1148 = vmatprep.subr.mxu0 0.0
      %1149 = vmatpush1.msra.mxu0 0.0
      %1150 = vmatprep.subr.mxu0 0.0
      %1151 = vmatpush1.msra.mxu0 0.0
      %1152 = vmatprep.subr.mxu0 0.0
      %1153 = vmatpush1.msra.mxu0 0.0
      %1154 = vmatprep.subr.mxu0 0.0
      %1155 = vmatpush1.msra.mxu0 0.0
      %1156 = vmatprep.subr.mxu0 0.0
      %1157 = vmatpush1.msra.mxu0 0.0
      %1158 = vmatprep.subr.mxu0 0.0
      %1159 = vmatpush1.msra.mxu0 0.0
      %1160 = vmatprep.subr.mxu0 0.0
      %1161 = vmatpush1.msra.mxu0 0.0
      %1162 = vmatprep.subr.mxu0 0.0
      %1163 = vmatpush1.msra.mxu0 0.0
      %1164 = vmatprep.subr.mxu0 0.0
      %1165 = vmatpush1.msra.mxu0 0.0
      %1166 = vmatprep.subr.mxu0 0.0
      %1167 = vmatpush1.msra.mxu0 0.0
      %1168 = vmatprep.subr.mxu0 0.0
      %1169 = vmatpush1.msra.mxu0 0.0
      %1170 = vmatprep.subr.mxu0 0.0
      %1171 = vmatpush1.msra.mxu0 0.0
      %1172 = vmatprep.subr.mxu0 0.0
      %1173 = vmatpush1.msra.mxu0 0.0
      %1174 = vmatprep.subr.mxu0 0.0
      %1175 = vmatpush1.msra.mxu0 0.0
      %1176 = vmatprep.subr.mxu0 0.0
      %1177 = vmatpush1.msra.mxu0 0.0
      %1178 = vmatprep.subr.mxu0 0.0
      %1179 = vmatpush1.msra.mxu0 0.0
      %1180 = vmatprep.subr.mxu0 0.0
      %1181 = vmatpush1.msra.mxu0 0.0
      %1182 = vmatprep.subr.mxu0 0.0
      %1183 = vmatpush1.msra.mxu0 0.0
      %1184 = vmatprep.subr.mxu0 0.0
      %1185 = vmatpush1.msra.mxu0 0.0
      %1186 = vmatprep.subr.mxu0 0.0
      %1187 = vmatpush1.msra.mxu0 0.0
      %1188 = vmatprep.subr.mxu0 0.0
      %1189 = vmatpush1.msra.mxu0 0.0
      %1190 = vmatprep.subr.mxu0 0.0
      %1191 = vmatpush1.msra.mxu0 0.0
      %1192 = vmatprep.subr.mxu0 0.0
      %1193 = vmatpush1.msra.mxu0 0.0
      %1194 = vmatprep.mubr.f32.mxu0 0.0
      %v1195 = vand.u32 %v901, 4294901760
      %1196 = vmatmul.mubr.f32.gmra.mrb[0].mxu0 %v1195
      %v1197 = vpop.f32.mrb[0].mxu0
      %v1198 = vadd.f32 %v1012, %v1197
      %v1199 = vpop.f32.mrb[0].mxu0
      %1200 = vmatprep.mubr.f32.mxu0 0.0
      %v1201 = vand.u32 %v904, 4294901760
      %1202 = vmatmul.mubr.f32.gmra.mrb[0].mxu0 %v1201
      %v1203 = vpop.f32.mrb[0].mxu0
      %v1204 = vadd.f32 %v1022, %v1203
      %v1205 = vpop.f32.mrb[0].mxu0
      %1206 = vmatprep.mubr.f32.mxu0 0.0
      %v1207 = vand.u32 %v907, 4294901760
      %1208 = vmatmul.mubr.f32.gmra.mrb[0].mxu0 %v1207
      %v1209 = vpop.f32.mrb[0].mxu0
      %v1210 = vadd.f32 %v1032, %v1209
      %v1211 = vpop.f32.mrb[0].mxu0
      %1212 = vmatprep.mubr.f32.mxu0 0.0
      %v1213 = vand.u32 %v910, 4294901760
      %1214 = vmatmul.mubr.f32.gmra.mrb[0].mxu0 %v1213
      %v1215 = vpop.f32.mrb[0].mxu0
      %v1216 = vadd.f32 %v1042, %v1215
      %v1217 = vpop.f32.mrb[0].mxu0
      %1218 = vmatprep.mubr.f32.mxu0 0.0
      %v1219 = vand.u32 %v913, 4294901760
      %1220 = vmatmul.mubr.f32.gmra.mrb[0].mxu0 %v1219
      %v1221 = vpop.f32.mrb[0].mxu0
      %v1222 = vadd.f32 %v1052, %v1221
      %v1223 = vpop.f32.mrb[0].mxu0
      %1224 = vmatprep.mubr.f32.mxu0 0.0
      %v1225 = vand.u32 %v916, 4294901760
      %1226 = vmatmul.mubr.f32.gmra.mrb[0].mxu0 %v1225
      %v1227 = vpop.f32.mrb[0].mxu0
      %v1228 = vadd.f32 %v1062, %v1227
      %v1229 = vpop.f32.mrb[0].mxu0
      %1230 = vmatprep.mubr.f32.mxu0 0.0
      %v1231 = vand.u32 %v919, 4294901760
      %1232 = vmatmul.mubr.f32.gmra.mrb[0].mxu0 %v1231
      %v1233 = vpop.f32.mrb[0].mxu0
      %v1234 = vadd.f32 %v1072, %v1233
      %v1235 = vpop.f32.mrb[0].mxu0
      %1236 = vmatprep.mubr.f32.mxu0 0.0
      %v1237 = vand.u32 %v922, 4294901760
      %1238 = vmatmul.mubr.f32.gmra.mrb[0].mxu0 %v1237
      %v1239 = vpop.f32.mrb[0].mxu0
      %v1240 = vadd.f32 %v1082, %v1239
      %v1241 = vpop.f32.mrb[0].mxu0
      %1242 = vmatprep.mubr.f32.mxu0 0.0
      %v1243 = vand.u32 %v925, 4294901760
      %1244 = vmatmul.mubr.f32.gmra.mrb[0].mxu0 %v1243
      %v1245 = vpop.f32.mrb[0].mxu0
      %v1246 = vadd.f32 %v1092, %v1245
      %v1247 = vpop.f32.mrb[0].mxu0
      %1248 = vmatprep.mubr.f32.mxu0 0.0
      %v1249 = vand.u32 %v928, 4294901760
      %1250 = vmatmul.mubr.f32.gmra.mrb[0].mxu0 %v1249
      %v1251 = vpop.f32.mrb[0].mxu0
      %v1252 = vadd.f32 %v1102, %v1251
      %v1253 = vpop.f32.mrb[0].mxu0
      %1254 = vmatprep.mubr.f32.mxu0 0.0
      %v1255 = vand.u32 %v931, 4294901760
      %1256 = vmatmul.mubr.f32.gmra.mrb[0].mxu0 %v1255
      %v1257 = vpop.f32.mrb[0].mxu0
      %v1258 = vadd.f32 %v1112, %v1257
      %v1259 = vpop.f32.mrb[0].mxu0
      %1260 = vdwg.mxu0
      %1261 = vmatprep.subr.mxu0 0.0
      %v1262 = vand.u32 %v312, 4294901760
      %v1263 = vsub.f32 %v312, %v1262
      %1264 = vmatpush1.msra.mxu0 %v1263
      %1265 = vmatprep.subr.mxu0 0.0
      %v1266 = vand.u32 %v313, 4294901760
      %v1267 = vsub.f32 %v313, %v1266
      %1268 = vmatpush1.msra.mxu0 %v1267
      %1269 = vmatprep.subr.mxu0 0.0
      %v1270 = vand.u32 %v935, 4294901760
      %v1271 = vsub.f32 %v935, %v1270
      %1272 = vmatpush1.msra.mxu0 %v1271
      %1273 = vmatprep.subr.mxu0 0.0
      %1274 = vmatpush1.msra.mxu0 0.0
      %1275 = vmatprep.subr.mxu0 0.0
      %1276 = vmatpush1.msra.mxu0 0.0
      %1277 = vmatprep.subr.mxu0 0.0
      %1278 = vmatpush1.msra.mxu0 0.0
      %1279 = vmatprep.subr.mxu0 0.0
      %1280 = vmatpush1.msra.mxu0 0.0
      %1281 = vmatprep.subr.mxu0 0.0
      %1282 = vmatpush1.msra.mxu0 0.0
      %1283 = vmatprep.subr.mxu0 0.0
      %1284 = vmatpush1.msra.mxu0 0.0
      %1285 = vmatprep.subr.mxu0 0.0
      %1286 = vmatpush1.msra.mxu0 0.0
      %1287 = vmatprep.subr.mxu0 0.0
      %1288 = vmatpush1.msra.mxu0 0.0
      %1289 = vmatprep.subr.mxu0 0.0
      %1290 = vmatpush1.msra.mxu0 0.0
      %1291 = vmatprep.subr.mxu0 0.0
      %1292 = vmatpush1.msra.mxu0 0.0
      %1293 = vmatprep.subr.mxu0 0.0
      %1294 = vmatpush1.msra.mxu0 0.0
      %1295 = vmatprep.subr.mxu0 0.0
      %1296 = vmatpush1.msra.mxu0 0.0
      %1297 = vmatprep.subr.mxu0 0.0
      %1298 = vmatpush1.msra.mxu0 0.0
      %1299 = vmatprep.subr.mxu0 0.0
      %1300 = vmatpush1.msra.mxu0 0.0
      %1301 = vmatprep.subr.mxu0 0.0
      %1302 = vmatpush1.msra.mxu0 0.0
      %1303 = vmatprep.subr.mxu0 0.0
      %1304 = vmatpush1.msra.mxu0 0.0
      %1305 = vmatprep.subr.mxu0 0.0
      %1306 = vmatpush1.msra.mxu0 0.0
      %1307 = vmatprep.subr.mxu0 0.0
      %1308 = vmatpush1.msra.mxu0 0.0
      %1309 = vmatprep.subr.mxu0 0.0
      %1310 = vmatpush1.msra.mxu0 0.0
      %1311 = vmatprep.subr.mxu0 0.0
      %1312 = vmatpush1.msra.mxu0 0.0
      %1313 = vmatprep.subr.mxu0 0.0
      %1314 = vmatpush1.msra.mxu0 0.0
      %1315 = vmatprep.subr.mxu0 0.0
      %1316 = vmatpush1.msra.mxu0 0.0
      %1317 = vmatprep.subr.mxu0 0.0
      %1318 = vmatpush1.msra.mxu0 0.0
      %1319 = vmatprep.subr.mxu0 0.0
      %1320 = vmatpush1.msra.mxu0 0.0
      %1321 = vmatprep.subr.mxu0 0.0
      %1322 = vmatpush1.msra.mxu0 0.0
      %1323 = vmatprep.subr.mxu0 0.0
      %1324 = vmatpush1.msra.mxu0 0.0
      %1325 = vmatprep.subr.mxu0 0.0
      %1326 = vmatpush1.msra.mxu0 0.0
      %1327 = vmatprep.subr.mxu0 0.0
      %1328 = vmatpush1.msra.mxu0 0.0
      %1329 = vmatprep.subr.mxu0 0.0
      %1330 = vmatpush1.msra.mxu0 0.0
      %1331 = vmatprep.mubr.f32.mxu0 0.0
      %v1332 = vand.u32 %v901, 4294901760
      %v1333 = vsub.f32 %v901, %v1332
      %1334 = vmatmul.mubr.f32.gmra.mrb[0].mxu0 %v1333
      %v1335 = vpop.f32.mrb[0].mxu0
      %v1336 = vadd.f32 %v1198, %v1335
      %v1337 = vpop.f32.mrb[0].mxu0
      %1338 = vmatprep.mubr.f32.mxu0 0.0
      %v1339 = vand.u32 %v904, 4294901760
      %v1340 = vsub.f32 %v904, %v1339
      %1341 = vmatmul.mubr.f32.gmra.mrb[0].mxu0 %v1340
      %v1342 = vpop.f32.mrb[0].mxu0
      %v1343 = vadd.f32 %v1204, %v1342
      %v1344 = vpop.f32.mrb[0].mxu0
      %1345 = vmatprep.mubr.f32.mxu0 0.0
      %v1346 = vand.u32 %v907, 4294901760
      %v1347 = vsub.f32 %v907, %v1346
      %1348 = vmatmul.mubr.f32.gmra.mrb[0].mxu0 %v1347
      %v1349 = vpop.f32.mrb[0].mxu0
      %v1350 = vadd.f32 %v1210, %v1349
      %v1351 = vpop.f32.mrb[0].mxu0
      %1352 = vmatprep.mubr.f32.mxu0 0.0
      %v1353 = vand.u32 %v910, 4294901760
      %v1354 = vsub.f32 %v910, %v1353
      %1355 = vmatmul.mubr.f32.gmra.mrb[0].mxu0 %v1354
      %v1356 = vpop.f32.mrb[0].mxu0
      %v1357 = vadd.f32 %v1216, %v1356
      %v1358 = vpop.f32.mrb[0].mxu0
      %1359 = vmatprep.mubr.f32.mxu0 0.0
      %v1360 = vand.u32 %v913, 4294901760
      %v1361 = vsub.f32 %v913, %v1360
      %1362 = vmatmul.mubr.f32.gmra.mrb[0].mxu0 %v1361
      %v1363 = vpop.f32.mrb[0].mxu0
      %v1364 = vadd.f32 %v1222, %v1363
      %v1365 = vpop.f32.mrb[0].mxu0
      %1366 = vmatprep.mubr.f32.mxu0 0.0
      %v1367 = vand.u32 %v916, 4294901760
      %v1368 = vsub.f32 %v916, %v1367
      %1369 = vmatmul.mubr.f32.gmra.mrb[0].mxu0 %v1368
      %v1370 = vpop.f32.mrb[0].mxu0
      %v1371 = vadd.f32 %v1228, %v1370
      %v1372 = vpop.f32.mrb[0].mxu0
      %1373 = vmatprep.mubr.f32.mxu0 0.0
      %v1374 = vand.u32 %v919, 4294901760
      %v1375 = vsub.f32 %v919, %v1374
      %1376 = vmatmul.mubr.f32.gmra.mrb[0].mxu0 %v1375
      %v1377 = vpop.f32.mrb[0].mxu0
      %v1378 = vadd.f32 %v1234, %v1377
      %v1379 = vpop.f32.mrb[0].mxu0
      %1380 = vmatprep.mubr.f32.mxu0 0.0
      %v1381 = vand.u32 %v922, 4294901760
      %v1382 = vsub.f32 %v922, %v1381
      %1383 = vmatmul.mubr.f32.gmra.mrb[0].mxu0 %v1382
      %v1384 = vpop.f32.mrb[0].mxu0
      %v1385 = vadd.f32 %v1240, %v1384
      %v1386 = vpop.f32.mrb[0].mxu0
      %1387 = vmatprep.mubr.f32.mxu0 0.0
      %v1388 = vand.u32 %v925, 4294901760
      %v1389 = vsub.f32 %v925, %v1388
      %1390 = vmatmul.mubr.f32.gmra.mrb[0].mxu0 %v1389
      %v1391 = vpop.f32.mrb[0].mxu0
      %v1392 = vadd.f32 %v1246, %v1391
      %v1393 = vpop.f32.mrb[0].mxu0
      %1394 = vmatprep.mubr.f32.mxu0 0.0
      %v1395 = vand.u32 %v928, 4294901760
      %v1396 = vsub.f32 %v928, %v1395
      %1397 = vmatmul.mubr.f32.gmra.mrb[0].mxu0 %v1396
      %v1398 = vpop.f32.mrb[0].mxu0
      %v1399 = vadd.f32 %v1252, %v1398
      %v1400 = vpop.f32.mrb[0].mxu0
      %1401 = vmatprep.mubr.f32.mxu0 0.0
      %v1402 = vand.u32 %v931, 4294901760
      %v1403 = vsub.f32 %v931, %v1402
      %1404 = vmatmul.mubr.f32.gmra.mrb[0].mxu0 %v1403
      %v1405 = vpop.f32.mrb[0].mxu0
      %v1406 = vadd.f32 %v1258, %v1405
      %v1407 = vpop.f32.mrb[0].mxu0
      %1408 = vdwg.mxu0
      %1409 = vmatprep.subr.mxu0 0.0
      %v1410 = vand.u32 %v312, 4294901760
      %1411 = vmatpush1.msra.mxu0 %v1410
      %1412 = vmatprep.subr.mxu0 0.0
      %v1413 = vand.u32 %v313, 4294901760
      %1414 = vmatpush1.msra.mxu0 %v1413
      %1415 = vmatprep.subr.mxu0 0.0
      %v1416 = vand.u32 %v935, 4294901760
      %1417 = vmatpush1.msra.mxu0 %v1416
      %1418 = vmatprep.subr.mxu0 0.0
      %1419 = vmatpush1.msra.mxu0 0.0
      %1420 = vmatprep.subr.mxu0 0.0
      %1421 = vmatpush1.msra.mxu0 0.0
      %1422 = vmatprep.subr.mxu0 0.0
      %1423 = vmatpush1.msra.mxu0 0.0
      %1424 = vmatprep.subr.mxu0 0.0
      %1425 = vmatpush1.msra.mxu0 0.0
      %1426 = vmatprep.subr.mxu0 0.0
      %1427 = vmatpush1.msra.mxu0 0.0
      %1428 = vmatprep.subr.mxu0 0.0
      %1429 = vmatpush1.msra.mxu0 0.0
      %1430 = vmatprep.subr.mxu0 0.0
      %1431 = vmatpush1.msra.mxu0 0.0
      %1432 = vmatprep.subr.mxu0 0.0
      %1433 = vmatpush1.msra.mxu0 0.0
      %1434 = vmatprep.subr.mxu0 0.0
      %1435 = vmatpush1.msra.mxu0 0.0
      %1436 = vmatprep.subr.mxu0 0.0
      %1437 = vmatpush1.msra.mxu0 0.0
      %1438 = vmatprep.subr.mxu0 0.0
      %1439 = vmatpush1.msra.mxu0 0.0
      %1440 = vmatprep.subr.mxu0 0.0
      %1441 = vmatpush1.msra.mxu0 0.0
      %1442 = vmatprep.subr.mxu0 0.0
      %1443 = vmatpush1.msra.mxu0 0.0
      %1444 = vmatprep.subr.mxu0 0.0
      %1445 = vmatpush1.msra.mxu0 0.0
      %1446 = vmatprep.subr.mxu0 0.0
      %1447 = vmatpush1.msra.mxu0 0.0
      %1448 = vmatprep.subr.mxu0 0.0
      %1449 = vmatpush1.msra.mxu0 0.0
      %1450 = vmatprep.subr.mxu0 0.0
      %1451 = vmatpush1.msra.mxu0 0.0
      %1452 = vmatprep.subr.mxu0 0.0
      %1453 = vmatpush1.msra.mxu0 0.0
      %1454 = vmatprep.subr.mxu0 0.0
      %1455 = vmatpush1.msra.mxu0 0.0
      %1456 = vmatprep.subr.mxu0 0.0
      %1457 = vmatpush1.msra.mxu0 0.0
      %1458 = vmatprep.subr.mxu0 0.0
      %1459 = vmatpush1.msra.mxu0 0.0
      %1460 = vmatprep.subr.mxu0 0.0
      %1461 = vmatpush1.msra.mxu0 0.0
      %1462 = vmatprep.subr.mxu0 0.0
      %1463 = vmatpush1.msra.mxu0 0.0
      %1464 = vmatprep.subr.mxu0 0.0
      %1465 = vmatpush1.msra.mxu0 0.0
      %1466 = vmatprep.subr.mxu0 0.0
      %1467 = vmatpush1.msra.mxu0 0.0
      %1468 = vmatprep.subr.mxu0 0.0
      %1469 = vmatpush1.msra.mxu0 0.0
      %1470 = vmatprep.subr.mxu0 0.0
      %1471 = vmatpush1.msra.mxu0 0.0
      %1472 = vmatprep.subr.mxu0 0.0
      %1473 = vmatpush1.msra.mxu0 0.0
      %1474 = vmatprep.subr.mxu0 0.0
      %1475 = vmatpush1.msra.mxu0 0.0
      %1476 = vmatprep.mubr.f32.mxu0 0.0
      %v1477 = vand.u32 %v901, 4294901760
      %v1478 = vsub.f32 %v901, %v1477
      %v1479 = vand.u32 %v1478, 4294901760
      %1480 = vmatmul.mubr.f32.gmra.mrb[0].mxu0 %v1479
      %v1481 = vpop.f32.mrb[0].mxu0
      %v1482 = vadd.f32 %v1336, %v1481
      %v1483 = vpop.f32.mrb[0].mxu0
      %1484 = vmatprep.mubr.f32.mxu0 0.0
      %v1485 = vand.u32 %v904, 4294901760
      %v1486 = vsub.f32 %v904, %v1485
      %v1487 = vand.u32 %v1486, 4294901760
      %1488 = vmatmul.mubr.f32.gmra.mrb[0].mxu0 %v1487
      %v1489 = vpop.f32.mrb[0].mxu0
      %v1490 = vadd.f32 %v1343, %v1489
      %v1491 = vpop.f32.mrb[0].mxu0
      %1492 = vmatprep.mubr.f32.mxu0 0.0
      %v1493 = vand.u32 %v907, 4294901760
      %v1494 = vsub.f32 %v907, %v1493
      %v1495 = vand.u32 %v1494, 4294901760
      %1496 = vmatmul.mubr.f32.gmra.mrb[0].mxu0 %v1495
      %v1497 = vpop.f32.mrb[0].mxu0
      %v1498 = vadd.f32 %v1350, %v1497
      %v1499 = vpop.f32.mrb[0].mxu0
      %1500 = vmatprep.mubr.f32.mxu0 0.0
      %v1501 = vand.u32 %v910, 4294901760
      %v1502 = vsub.f32 %v910, %v1501
      %v1503 = vand.u32 %v1502, 4294901760
      %1504 = vmatmul.mubr.f32.gmra.mrb[0].mxu0 %v1503
      %v1505 = vpop.f32.mrb[0].mxu0
      %v1506 = vadd.f32 %v1357, %v1505
      %v1507 = vpop.f32.mrb[0].mxu0
      %1508 = vmatprep.mubr.f32.mxu0 0.0
      %v1509 = vand.u32 %v913, 4294901760
      %v1510 = vsub.f32 %v913, %v1509
      %v1511 = vand.u32 %v1510, 4294901760
      %1512 = vmatmul.mubr.f32.gmra.mrb[0].mxu0 %v1511
      %v1513 = vpop.f32.mrb[0].mxu0
      %v1514 = vadd.f32 %v1364, %v1513
      %v1515 = vpop.f32.mrb[0].mxu0
      %1516 = vmatprep.mubr.f32.mxu0 0.0
      %v1517 = vand.u32 %v916, 4294901760
      %v1518 = vsub.f32 %v916, %v1517
      %v1519 = vand.u32 %v1518, 4294901760
      %1520 = vmatmul.mubr.f32.gmra.mrb[0].mxu0 %v1519
      %v1521 = vpop.f32.mrb[0].mxu0
      %v1522 = vadd.f32 %v1371, %v1521
      %v1523 = vpop.f32.mrb[0].mxu0
      %1524 = vmatprep.mubr.f32.mxu0 0.0
      %v1525 = vand.u32 %v919, 4294901760
      %v1526 = vsub.f32 %v919, %v1525
      %v1527 = vand.u32 %v1526, 4294901760
      %1528 = vmatmul.mubr.f32.gmra.mrb[0].mxu0 %v1527
      %v1529 = vpop.f32.mrb[0].mxu0
      %v1530 = vadd.f32 %v1378, %v1529
      %v1531 = vpop.f32.mrb[0].mxu0
      %1532 = vmatprep.mubr.f32.mxu0 0.0
      %v1533 = vand.u32 %v922, 4294901760
      %v1534 = vsub.f32 %v922, %v1533
      %v1535 = vand.u32 %v1534, 4294901760
      %1536 = vmatmul.mubr.f32.gmra.mrb[0].mxu0 %v1535
      %v1537 = vpop.f32.mrb[0].mxu0
      %v1538 = vadd.f32 %v1385, %v1537
      %v1539 = vpop.f32.mrb[0].mxu0
      %1540 = vmatprep.mubr.f32.mxu0 0.0
      %v1541 = vand.u32 %v925, 4294901760
      %v1542 = vsub.f32 %v925, %v1541
      %v1543 = vand.u32 %v1542, 4294901760
      %1544 = vmatmul.mubr.f32.gmra.mrb[0].mxu0 %v1543
      %v1545 = vpop.f32.mrb[0].mxu0
      %v1546 = vadd.f32 %v1392, %v1545
      %v1547 = vpop.f32.mrb[0].mxu0
      %1548 = vmatprep.mubr.f32.mxu0 0.0
      %v1549 = vand.u32 %v928, 4294901760
      %v1550 = vsub.f32 %v928, %v1549
      %v1551 = vand.u32 %v1550, 4294901760
      %1552 = vmatmul.mubr.f32.gmra.mrb[0].mxu0 %v1551
      %v1553 = vpop.f32.mrb[0].mxu0
      %v1554 = vadd.f32 %v1399, %v1553
      %v1555 = vpop.f32.mrb[0].mxu0
      %1556 = vmatprep.mubr.f32.mxu0 0.0
      %v1557 = vand.u32 %v931, 4294901760
      %v1558 = vsub.f32 %v931, %v1557
      %v1559 = vand.u32 %v1558, 4294901760
      %1560 = vmatmul.mubr.f32.gmra.mrb[0].mxu0 %v1559
      %v1561 = vpop.f32.mrb[0].mxu0
      %v1562 = vadd.f32 %v1406, %v1561
      %v1563 = vpop.f32.mrb[0].mxu0
      %1564 = vdwg.mxu0
      %1565 = vmatprep.subr.mxu0 0.0
      %v1566 = vand.u32 %v312, 4294901760
      %v1567 = vsub.f32 %v312, %v1566
      %v1568 = vand.u32 %v1567, 4294901760
      %1569 = vmatpush1.msra.mxu0 %v1568
      %1570 = vmatprep.subr.mxu0 0.0
      %v1571 = vand.u32 %v313, 4294901760
      %v1572 = vsub.f32 %v313, %v1571
      %v1573 = vand.u32 %v1572, 4294901760
      %1574 = vmatpush1.msra.mxu0 %v1573
      %1575 = vmatprep.subr.mxu0 0.0
      %v1576 = vand.u32 %v935, 4294901760
      %v1577 = vsub.f32 %v935, %v1576
      %v1578 = vand.u32 %v1577, 4294901760
      %1579 = vmatpush1.msra.mxu0 %v1578
      %1580 = vmatprep.subr.mxu0 0.0
      %1581 = vmatpush1.msra.mxu0 0.0
      %1582 = vmatprep.subr.mxu0 0.0
      %1583 = vmatpush1.msra.mxu0 0.0
      %1584 = vmatprep.subr.mxu0 0.0
      %1585 = vmatpush1.msra.mxu0 0.0
      %1586 = vmatprep.subr.mxu0 0.0
      %1587 = vmatpush1.msra.mxu0 0.0
      %1588 = vmatprep.subr.mxu0 0.0
      %1589 = vmatpush1.msra.mxu0 0.0
      %1590 = vmatprep.subr.mxu0 0.0
      %1591 = vmatpush1.msra.mxu0 0.0
      %1592 = vmatprep.subr.mxu0 0.0
      %1593 = vmatpush1.msra.mxu0 0.0
      %1594 = vmatprep.subr.mxu0 0.0
      %1595 = vmatpush1.msra.mxu0 0.0
      %1596 = vmatprep.subr.mxu0 0.0
      %1597 = vmatpush1.msra.mxu0 0.0
      %1598 = vmatprep.subr.mxu0 0.0
      %1599 = vmatpush1.msra.mxu0 0.0
      %1600 = vmatprep.subr.mxu0 0.0
      %1601 = vmatpush1.msra.mxu0 0.0
      %1602 = vmatprep.subr.mxu0 0.0
      %1603 = vmatpush1.msra.mxu0 0.0
      %1604 = vmatprep.subr.mxu0 0.0
      %1605 = vmatpush1.msra.mxu0 0.0
      %1606 = vmatprep.subr.mxu0 0.0
      %1607 = vmatpush1.msra.mxu0 0.0
      %1608 = vmatprep.subr.mxu0 0.0
      %1609 = vmatpush1.msra.mxu0 0.0
      %1610 = vmatprep.subr.mxu0 0.0
      %1611 = vmatpush1.msra.mxu0 0.0
      %1612 = vmatprep.subr.mxu0 0.0
      %1613 = vmatpush1.msra.mxu0 0.0
      %1614 = vmatprep.subr.mxu0 0.0
      %1615 = vmatpush1.msra.mxu0 0.0
      %1616 = vmatprep.subr.mxu0 0.0
      %1617 = vmatpush1.msra.mxu0 0.0
      %1618 = vmatprep.subr.mxu0 0.0
      %1619 = vmatpush1.msra.mxu0 0.0
      %1620 = vmatprep.subr.mxu0 0.0
      %1621 = vmatpush1.msra.mxu0 0.0
      %1622 = vmatprep.subr.mxu0 0.0
      %1623 = vmatpush1.msra.mxu0 0.0
      %1624 = vmatprep.subr.mxu0 0.0
      %1625 = vmatpush1.msra.mxu0 0.0
      %1626 = vmatprep.subr.mxu0 0.0
      %1627 = vmatpush1.msra.mxu0 0.0
      %1628 = vmatprep.subr.mxu0 0.0
      %1629 = vmatpush1.msra.mxu0 0.0
      %1630 = vmatprep.subr.mxu0 0.0
      %1631 = vmatpush1.msra.mxu0 0.0
      %1632 = vmatprep.subr.mxu0 0.0
      %1633 = vmatpush1.msra.mxu0 0.0
      %1634 = vmatprep.subr.mxu0 0.0
      %1635 = vmatpush1.msra.mxu0 0.0
      %1636 = vmatprep.subr.mxu0 0.0
      %1637 = vmatpush1.msra.mxu0 0.0
      %1638 = vmatprep.mubr.f32.mxu0 0.0
      %v1639 = vand.u32 %v901, 4294901760
      %1640 = vmatmul.mubr.f32.gmra.mrb[0].mxu0 %v1639
      %v1641 = vpop.f32.mrb[0].mxu0
      %v1642 = vadd.f32 %v1482, %v1641
      %v1643 = vpop.f32.mrb[0].mxu0
      %1644 = vmatprep.mubr.f32.mxu0 0.0
      %v1645 = vand.u32 %v904, 4294901760
      %1646 = vmatmul.mubr.f32.gmra.mrb[0].mxu0 %v1645
      %v1647 = vpop.f32.mrb[0].mxu0
      %v1648 = vadd.f32 %v1490, %v1647
      %v1649 = vpop.f32.mrb[0].mxu0
      %1650 = vmatprep.mubr.f32.mxu0 0.0
      %v1651 = vand.u32 %v907, 4294901760
      %1652 = vmatmul.mubr.f32.gmra.mrb[0].mxu0 %v1651
      %v1653 = vpop.f32.mrb[0].mxu0
      %v1654 = vadd.f32 %v1498, %v1653
      %v1655 = vpop.f32.mrb[0].mxu0
      %1656 = vmatprep.mubr.f32.mxu0 0.0
      %v1657 = vand.u32 %v910, 4294901760
      %1658 = vmatmul.mubr.f32.gmra.mrb[0].mxu0 %v1657
      %v1659 = vpop.f32.mrb[0].mxu0
      %v1660 = vadd.f32 %v1506, %v1659
      %v1661 = vpop.f32.mrb[0].mxu0
      %1662 = vmatprep.mubr.f32.mxu0 0.0
      %v1663 = vand.u32 %v913, 4294901760
      %1664 = vmatmul.mubr.f32.gmra.mrb[0].mxu0 %v1663
      %v1665 = vpop.f32.mrb[0].mxu0
      %v1666 = vadd.f32 %v1514, %v1665
      %v1667 = vpop.f32.mrb[0].mxu0
      %1668 = vmatprep.mubr.f32.mxu0 0.0
      %v1669 = vand.u32 %v916, 4294901760
      %1670 = vmatmul.mubr.f32.gmra.mrb[0].mxu0 %v1669
      %v1671 = vpop.f32.mrb[0].mxu0
      %v1672 = vadd.f32 %v1522, %v1671
      %v1673 = vpop.f32.mrb[0].mxu0
      %1674 = vmatprep.mubr.f32.mxu0 0.0
      %v1675 = vand.u32 %v919, 4294901760
      %1676 = vmatmul.mubr.f32.gmra.mrb[0].mxu0 %v1675
      %v1677 = vpop.f32.mrb[0].mxu0
      %v1678 = vadd.f32 %v1530, %v1677
      %v1679 = vpop.f32.mrb[0].mxu0
      %1680 = vmatprep.mubr.f32.mxu0 0.0
      %v1681 = vand.u32 %v922, 4294901760
      %1682 = vmatmul.mubr.f32.gmra.mrb[0].mxu0 %v1681
      %v1683 = vpop.f32.mrb[0].mxu0
      %v1684 = vadd.f32 %v1538, %v1683
      %v1685 = vpop.f32.mrb[0].mxu0
      %1686 = vmatprep.mubr.f32.mxu0 0.0
      %v1687 = vand.u32 %v925, 4294901760
      %1688 = vmatmul.mubr.f32.gmra.mrb[0].mxu0 %v1687
      %v1689 = vpop.f32.mrb[0].mxu0
      %v1690 = vadd.f32 %v1546, %v1689
      %v1691 = vpop.f32.mrb[0].mxu0
      %1692 = vmatprep.mubr.f32.mxu0 0.0
      %v1693 = vand.u32 %v928, 4294901760
      %1694 = vmatmul.mubr.f32.gmra.mrb[0].mxu0 %v1693
      %v1695 = vpop.f32.mrb[0].mxu0
      %v1696 = vadd.f32 %v1554, %v1695
      %v1697 = vpop.f32.mrb[0].mxu0
      %1698 = vmatprep.mubr.f32.mxu0 0.0
      %v1699 = vand.u32 %v931, 4294901760
      %1700 = vmatmul.mubr.f32.gmra.mrb[0].mxu0 %v1699
      %v1701 = vpop.f32.mrb[0].mxu0
      %v1702 = vadd.f32 %v1562, %v1701
      %v1703 = vpop.f32.mrb[0].mxu0
      %1704 = vdwg.mxu0
      %1705 = vmatprep.subr.mxu0 0.0
      %v1706 = vand.u32 %v312, 4294901760
      %1707 = vmatpush1.msra.mxu0 %v1706
      %1708 = vmatprep.subr.mxu0 0.0
      %v1709 = vand.u32 %v313, 4294901760
      %1710 = vmatpush1.msra.mxu0 %v1709
      %1711 = vmatprep.subr.mxu0 0.0
      %v1712 = vand.u32 %v935, 4294901760
      %1713 = vmatpush1.msra.mxu0 %v1712
      %1714 = vmatprep.subr.mxu0 0.0
      %1715 = vmatpush1.msra.mxu0 0.0
      %1716 = vmatprep.subr.mxu0 0.0
      %1717 = vmatpush1.msra.mxu0 0.0
      %1718 = vmatprep.subr.mxu0 0.0
      %1719 = vmatpush1.msra.mxu0 0.0
      %1720 = vmatprep.subr.mxu0 0.0
      %1721 = vmatpush1.msra.mxu0 0.0
      %1722 = vmatprep.subr.mxu0 0.0
      %1723 = vmatpush1.msra.mxu0 0.0
      %1724 = vmatprep.subr.mxu0 0.0
      %1725 = vmatpush1.msra.mxu0 0.0
      %1726 = vmatprep.subr.mxu0 0.0
      %1727 = vmatpush1.msra.mxu0 0.0
      %1728 = vmatprep.subr.mxu0 0.0
      %1729 = vmatpush1.msra.mxu0 0.0
      %1730 = vmatprep.subr.mxu0 0.0
      %1731 = vmatpush1.msra.mxu0 0.0
      %1732 = vmatprep.subr.mxu0 0.0
      %1733 = vmatpush1.msra.mxu0 0.0
      %1734 = vmatprep.subr.mxu0 0.0
      %1735 = vmatpush1.msra.mxu0 0.0
      %1736 = vmatprep.subr.mxu0 0.0
      %1737 = vmatpush1.msra.mxu0 0.0
      %1738 = vmatprep.subr.mxu0 0.0
      %1739 = vmatpush1.msra.mxu0 0.0
      %1740 = vmatprep.subr.mxu0 0.0
      %1741 = vmatpush1.msra.mxu0 0.0
      %1742 = vmatprep.subr.mxu0 0.0
      %1743 = vmatpush1.msra.mxu0 0.0
      %1744 = vmatprep.subr.mxu0 0.0
      %1745 = vmatpush1.msra.mxu0 0.0
      %1746 = vmatprep.subr.mxu0 0.0
      %1747 = vmatpush1.msra.mxu0 0.0
      %1748 = vmatprep.subr.mxu0 0.0
      %1749 = vmatpush1.msra.mxu0 0.0
      %1750 = vmatprep.subr.mxu0 0.0
      %1751 = vmatpush1.msra.mxu0 0.0
      %1752 = vmatprep.subr.mxu0 0.0
      %1753 = vmatpush1.msra.mxu0 0.0
      %1754 = vmatprep.subr.mxu0 0.0
      %1755 = vmatpush1.msra.mxu0 0.0
      %1756 = vmatprep.subr.mxu0 0.0
      %1757 = vmatpush1.msra.mxu0 0.0
      %1758 = vmatprep.subr.mxu0 0.0
      %1759 = vmatpush1.msra.mxu0 0.0
      %1760 = vmatprep.subr.mxu0 0.0
      %1761 = vmatpush1.msra.mxu0 0.0
      %1762 = vmatprep.subr.mxu0 0.0
      %1763 = vmatpush1.msra.mxu0 0.0
      %1764 = vmatprep.subr.mxu0 0.0
      %1765 = vmatpush1.msra.mxu0 0.0
      %1766 = vmatprep.subr.mxu0 0.0
      %1767 = vmatpush1.msra.mxu0 0.0
      %1768 = vmatprep.subr.mxu0 0.0
      %1769 = vmatpush1.msra.mxu0 0.0
      %1770 = vmatprep.subr.mxu0 0.0
      %1771 = vmatpush1.msra.mxu0 0.0
      %1772 = vmatprep.mubr.f32.mxu0 0.0
      %v1773 = vand.u32 %v901, 4294901760
      %1774 = vmatmul.mubr.f32.gmra.mrb[0].mxu0 %v1773
      %v1775 = vpop.f32.mrb[0].mxu0
      %v1776 = vadd.f32 %v1642, %v1775
      %v1777 = vpop.f32.mrb[0].mxu0
      %1778 = vmatprep.mubr.f32.mxu0 0.0
      %v1779 = vand.u32 %v904, 4294901760
      %1780 = vmatmul.mubr.f32.gmra.mrb[0].mxu0 %v1779
      %v1781 = vpop.f32.mrb[0].mxu0
      %v1782 = vadd.f32 %v1648, %v1781
      %v1783 = vpop.f32.mrb[0].mxu0
      %1784 = vmatprep.mubr.f32.mxu0 0.0
      %v1785 = vand.u32 %v907, 4294901760
      %1786 = vmatmul.mubr.f32.gmra.mrb[0].mxu0 %v1785
      %v1787 = vpop.f32.mrb[0].mxu0
      %v1788 = vadd.f32 %v1654, %v1787
      %v1789 = vpop.f32.mrb[0].mxu0
      %1790 = vmatprep.mubr.f32.mxu0 0.0
      %v1791 = vand.u32 %v910, 4294901760
      %1792 = vmatmul.mubr.f32.gmra.mrb[0].mxu0 %v1791
      %v1793 = vpop.f32.mrb[0].mxu0
      %v1794 = vadd.f32 %v1660, %v1793
      %v1795 = vpop.f32.mrb[0].mxu0
      %1796 = vmatprep.mubr.f32.mxu0 0.0
      %v1797 = vand.u32 %v913, 4294901760
      %1798 = vmatmul.mubr.f32.gmra.mrb[0].mxu0 %v1797
      %v1799 = vpop.f32.mrb[0].mxu0
      %v1800 = vadd.f32 %v1666, %v1799
      %v1801 = vpop.f32.mrb[0].mxu0
      %1802 = vmatprep.mubr.f32.mxu0 0.0
      %v1803 = vand.u32 %v916, 4294901760
      %1804 = vmatmul.mubr.f32.gmra.mrb[0].mxu0 %v1803
      %v1805 = vpop.f32.mrb[0].mxu0
      %v1806 = vadd.f32 %v1672, %v1805
      %v1807 = vpop.f32.mrb[0].mxu0
      %1808 = vmatprep.mubr.f32.mxu0 0.0
      %v1809 = vand.u32 %v919, 4294901760
      %1810 = vmatmul.mubr.f32.gmra.mrb[0].mxu0 %v1809
      %v1811 = vpop.f32.mrb[0].mxu0
      %v1812 = vadd.f32 %v1678, %v1811
      %v1813 = vpop.f32.mrb[0].mxu0
      %1814 = vmatprep.mubr.f32.mxu0 0.0
      %v1815 = vand.u32 %v922, 4294901760
      %1816 = vmatmul.mubr.f32.gmra.mrb[0].mxu0 %v1815
      %v1817 = vpop.f32.mrb[0].mxu0
      %v1818 = vadd.f32 %v1684, %v1817
      %v1819 = vpop.f32.mrb[0].mxu0
      %1820 = vmatprep.mubr.f32.mxu0 0.0
      %v1821 = vand.u32 %v925, 4294901760
      %1822 = vmatmul.mubr.f32.gmra.mrb[0].mxu0 %v1821
      %v1823 = vpop.f32.mrb[0].mxu0
      %v1824 = vadd.f32 %v1690, %v1823
      %v1825 = vpop.f32.mrb[0].mxu0
      %1826 = vmatprep.mubr.f32.mxu0 0.0
      %v1827 = vand.u32 %v928, 4294901760
      %1828 = vmatmul.mubr.f32.gmra.mrb[0].mxu0 %v1827
      %v1829 = vpop.f32.mrb[0].mxu0
      %v1830 = vadd.f32 %v1696, %v1829
      %v1831 = vpop.f32.mrb[0].mxu0
      %1832 = vmatprep.mubr.f32.mxu0 0.0
      %v1833 = vand.u32 %v931, 4294901760
      %1834 = vmatmul.mubr.f32.gmra.mrb[0].mxu0 %v1833
      %v1835 = vpop.f32.mrb[0].mxu0
      %v1836 = vadd.f32 %v1702, %v1835
      %v1837 = vpop.f32.mrb[0].mxu0
      %1838 = vdwg.mxu0
      %v1839 = vld [vmem:[#allocation2] sm:$0xff]
      %v1840 = vld [vmem:[#allocation2 + $0x8] sm:$0xff]
      %v1841 = vld [vmem:[#allocation2 + $0x10] sm:$0xff]
      %v1842 = vld [vmem:[#allocation2 + $0x18] sm:$0xff]
      %v1843 = vld [vmem:[#allocation2 + $0x20] sm:$0xff]
      %v1844 = vld [vmem:[#allocation2 + $0x28] sm:$0xff]
      %v1845 = vld [vmem:[#allocation2 + $0x30] sm:$0xff]
      %v1846 = vld [vmem:[#allocation2 + $0x38] sm:$0xff]
      %v1847 = vld [vmem:[#allocation2 + $0x40] sm:$0xff]
      %v1848 = vld [vmem:[#allocation2 + $0x48] sm:$0xff]
      %v1849 = vld [vmem:[#allocation2 + $0x50] sm:$0xff]
      %v1850 = vadd.f32 %v1839, %v1776
      %v1851 = vadd.f32 %v1840, %v1782
      %v1852 = vadd.f32 %v1841, %v1788
      %v1853 = vadd.f32 %v1842, %v1794
      %v1854 = vadd.f32 %v1843, %v1800
      %v1855 = vadd.f32 %v1844, %v1806
      %v1856 = vadd.f32 %v1845, %v1812
      %v1857 = vadd.f32 %v1846, %v1818
      %v1858 = vadd.f32 %v1847, %v1824
      %v1859 = vadd.f32 %v1848, %v1830
      %v1860 = vadd.f32 %v1849, %v1836
      %vm1861 = vcmask 7168
      %1862 = vst.msk [vmem:[#allocation2] sm:$0xff] %vm1861, %v1850
      %1863 = vst.msk [vmem:[#allocation2 + $0x8] sm:$0xff] %vm1861, %v1851
      %1864 = vst.msk [vmem:[#allocation2 + $0x10] sm:$0xff] %vm1861, %v1852
      %1865 = vst.msk [vmem:[#allocation2 + $0x18] sm:$0xff] %vm1861, %v1853
      %1866 = vst.msk [vmem:[#allocation2 + $0x20] sm:$0xff] %vm1861, %v1854
      %1867 = vst.msk [vmem:[#allocation2 + $0x28] sm:$0xff] %vm1861, %v1855
      %1868 = vst.msk [vmem:[#allocation2 + $0x30] sm:$0xff] %vm1861, %v1856
      %1869 = vst.msk [vmem:[#allocation2 + $0x38] sm:$0xff] %vm1861, %v1857
      %1870 = vst.msk [vmem:[#allocation2 + $0x40] sm:$0xff] %vm1861, %v1858
      %1871 = vst.msk [vmem:[#allocation2 + $0x48] sm:$0xff] %vm1861, %v1859
      %1872 = vst.msk [vmem:[#allocation2 + $0x50] sm:$0xff] %vm1861, %v1860
      // Predicated region
      $region41: #{tpu_custom_call.1} parent=35 // pred_check
        %p1873 = pneg %p292
      $region42: #{tpu_custom_call.1} parent=35 // pred_check_branch
        %1875 = sbr.rel (%p1873) target = $region44
      $region43: #{tpu_custom_call.1} parent=35 // pred_region
        %v1876 = vld [vmem:[%s278] sm:$0xff]
        %v1877 = vld [vmem:[#allocation2] sm:$0xff]
        %v1878 = vld [vmem:[#allocation2 + $0x8] sm:$0xff]
        %v1879 = vld [vmem:[#allocation2 + $0x10] sm:$0xff]
        %v1880 = vld [vmem:[#allocation2 + $0x18] sm:$0xff]
        %v1881 = vld [vmem:[#allocation2 + $0x20] sm:$0xff]
        %v1882 = vld [vmem:[#allocation2 + $0x28] sm:$0xff]
        %v1883 = vld [vmem:[#allocation2 + $0x30] sm:$0xff]
        %v1884 = vld [vmem:[#allocation2 + $0x38] sm:$0xff]
        %v1885 = vld [vmem:[#allocation2 + $0x40] sm:$0xff]
        %v1886 = vld [vmem:[#allocation2 + $0x48] sm:$0xff]
        %v1887 = vld [vmem:[#allocation2 + $0x50] sm:$0xff]
        %v1888 = vmul.f32 %v1877, %v1876
        %v1889 = vlog2.pop %v1888
        %v1890 = vmul.f32 %v1889, 0.6931472
        %v1891 = vmul.f32 %v1890, -0.32952663
        %v1892 = vadd.f32 %v1891, 0.0
        %v1893 = vmul.f32 %v1878, %v1876
        %v1894 = vlog2.pop %v1893
        %v1895 = vmul.f32 %v1894, 0.6931472
        %v1896 = vmul.f32 %v1895, 0.33085546
        %v1897 = vadd.f32 %v1892, %v1896
        %v1898 = vmul.f32 %v1879, %v1876
        %v1899 = vlog2.pop %v1898
        %v1900 = vmul.f32 %v1899, 0.6931472
        %v1901 = vmul.f32 %v1900, 0.6416613
        %v1902 = vadd.f32 %v1897, %v1901
        %v1903 = vmul.f32 %v1880, %v1876
        %v1904 = vlog2.pop %v1903
        %v1905 = vmul.f32 %v1904, 0.6931472
        %v1906 = vmul.f32 %v1905, -0.41077027
        %v1907 = vadd.f32 %v1902, %v1906
        %v1908 = vmul.f32 %v1881, %v1876
        %v1909 = vlog2.pop %v1908
        %v1910 = vmul.f32 %v1909, 0.6931472
        %v1911 = vmul.f32 %v1910, -0.6943995
        %v1912 = vadd.f32 %v1907, %v1911
        %v1913 = vmul.f32 %v1882, %v1876
        %v1914 = vlog2.pop %v1913
        %v1915 = vmul.f32 %v1914, 0.6931472
        %v1916 = vmul.f32 %v1915, 0.44527826
        %v1917 = vadd.f32 %v1912, %v1916
        %v1918 = vmul.f32 %v1883, %v1876
        %v1919 = vlog2.pop %v1918
        %v1920 = vmul.f32 %v1919, 0.6931472
        %v1921 = vmul.f32 %v1920, 0.6056227
        %v1922 = vadd.f32 %v1917, %v1921
        %v1923 = vmul.f32 %v1884, %v1876
        %v1924 = vlog2.pop %v1923
        %v1925 = vmul.f32 %v1924, 0.6931472
        %v1926 = vmul.f32 %v1925, -0.3171444
        %v1927 = vadd.f32 %v1922, %v1926
        %v1928 = vmul.f32 %v1885, %v1876
        %v1929 = vlog2.pop %v1928
        %v1930 = vmul.f32 %v1929, 0.6931472
        %v1931 = vmul.f32 %v1930, 0.5468956
        %v1932 = vadd.f32 %v1927, %v1931
        %v1933 = vmul.f32 %v1886, %v1876
        %v1934 = vlog2.pop %v1933
        %v1935 = vmul.f32 %v1934, 0.6931472
        %v1936 = vmul.f32 %v1935, 0.60810465
        %v1937 = vadd.f32 %v1932, %v1936
        %v1938 = vmul.f32 %v1887, %v1876
        %v1939 = vlog2.pop %v1938
        %v1940 = vmul.f32 %v1939, 0.6931472
        %v1941 = vmul.f32 %v1940, -0.6497503
        %v1942 = vadd.f32 %v1937, %v1941
        %v1943 = vsel %vm1861, %v1942, 0.0
        %1944 = vadd.xlane.f32.xlu0 %v1943
        %v1945 = vpop.xlane.xlu0 %1944
        %v1946 = vrot.slane %v1945, 4
        %v1947 = vadd.f32 %v1945, %v1946
        %v1948 = vrot.slane %v1947, 2
        %v1949 = vadd.f32 %v1947, %v1948
        %v1950 = vrot.slane %v1949, 1
        %v1951 = vadd.f32 %v1949, %v1950
        %vm1952 = vcmask 0
        %1953 = vst.msk [vmem:[%s291] sm:$0x1] %vm1952, %v1951
      $region44: #{tpu_custom_call.1} parent=35 // pred_fallthru
        _
      %p1954 = scmp.lt.s32.totalorder %s19, 1
      %s1955 = scalar_select %p1954, %s19, 1
      %s1956 = scalar_lea.vmem %s4, %s1955
      // Predicated region
      $region45: #{tpu_custom_call.1} parent=35 // pred_check
        %p1957 = pneg %p153
      $region46: #{tpu_custom_call.1} parent=35 // pred_check_branch
        %1959 = sbr.rel (%p1957) target = $region48
      $region47: #{tpu_custom_call.1} parent=35 // pred_region
        _
      $region48: #{tpu_custom_call.1} parent=35 // pred_fallthru
        _
    $region36: #{tpu_custom_call.1} parent=5 // pred_fallthru
      _
    %p1960 = scmp.le.s32.totalorder 2, %s10
    // Predicated region
    $region49: #{tpu_custom_call.1} parent=5 // pred_check
      %p1961 = pneg %p1960
    $region50: #{tpu_custom_call.1} parent=5 // pred_check_branch
      %1963 = sbr.rel (%p1961) target = $region52
    $region51: #{tpu_custom_call.1} parent=5 // pred_region
      %s1964 = ssub.s32 %s10, 2
      // Predicated region
      $region53: #{tpu_custom_call.1} parent=51 // pred_check
        %p1965 = pneg %p159
      $region54: #{tpu_custom_call.1} parent=51 // pred_check_branch
        %1967 = sbr.rel (%p1965) target = $region56
      $region55: #{tpu_custom_call.1} parent=51 // pred_region
        %p1968 = scmp.lt.s32.totalorder %s21, 1
        %s1969 = scalar_select %p1968, %s21, 1
        %s1970 = scalar_lea.vmem %s4, %s1969
      $region56: #{tpu_custom_call.1} parent=51 // pred_fallthru
        _
    $region52: #{tpu_custom_call.1} parent=5 // pred_fallthru
      _
  $region6: #{tpu_custom_call.1} parent=0 // loop_footer
    %s14 = sadd.s32 1, %s10
  $region7: #{tpu_custom_call.1} parent=0 // loop_footer_branch
    %9 = sbr.rel target = $region3
  $region8: #{tpu_custom_call.1} parent=0 // loop_exit
    _

</llo_original>
